<compile_context>
chip_gen: v7x
topology: tpu7x:2x2x1
jax: 0.10.0
libtpu: 0.0.40
codegen_flags: <defaults>
</compile_context>

<pallas_src>
import math

import numpy as np
import jax
import jax.numpy as jnp
from jax.experimental import pallas as pl
from jax.experimental.pallas import tpu as pltpu

_C1 = 0.01 ** 2
_C2 = 0.03 ** 2


def _gaussian_1d(window_size: int, sigma: float = 1.5) -> np.ndarray:
    g = np.array(
        [math.exp(-((x - window_size // 2) ** 2) / float(2 * sigma ** 2))
         for x in range(window_size)],
        dtype=np.float64,
    )
    g = g / g.sum()
    return g.astype(np.float32)


def _band_matrix(n: int, window_size: int) -> np.ndarray:
    """Matrix A s.t. (A @ x)[i] = sum_k g[k] * x_zero_padded[i + k] ("same" conv)."""
    g = _gaussian_1d(window_size)
    pad = window_size // 2
    a = np.zeros((n, n), dtype=np.float32)
    for i in range(n):
        for k in range(window_size):
            j = i + k - pad
            if 0 <= j < n:
                a[i, j] = g[k]
    return a


def _make_ssim_kernel(C: int, H: int, W: int, matmul_dtype):
    def kernel(img1_ref, img2_ref, ah_ref, awt_ref, out_ref):
        # Block shapes: img*_ref (1, C, H, W); ah_ref (H, H); awt_ref (W, W);
        # out_ref (1, C, W) -- per-(b, c, w) partial sums of the SSIM map.
        x1 = img1_ref[0].astype(jnp.float32)          # (C, H, W)
        x2 = img2_ref[0].astype(jnp.float32)          # (C, H, W)
        ah = ah_ref[...]                              # (H, H), matmul_dtype
        awt = awt_ref[...]                            # (W, W), matmul_dtype

        def gconv(q):
            """Depthwise separable 'same' Gaussian conv of q (C,H,W); f32 accumulate."""
            qm = q.astype(matmul_dtype)
            # W-direction: one (C*H, W) @ (W, W) MXU matmul (leading-dim reshape is free).
            yw = jnp.dot(
                qm.reshape(C * H, W), awt,
                preferred_element_type=jnp.float32,
            ).reshape(C, H, W)
            # H-direction: unrolled per-channel (H,H)@(H,W) matmuls.  yw[c] is a
            # free leading-dim view; no (5C,H,H) band-matrix broadcast in VMEM.
            rows = [
                jnp.dot(ah, yw[c].astype(matmul_dtype),
                        preferred_element_type=jnp.float32)
                for c in range(C)
            ]
            return jnp.stack(rows, axis=0)            # (C, H, W) f32

        # Stream the five smoothed statistics one at a time (no (5C,H,W) stack).
        mu1 = gconv(x1)
        mu2 = gconv(x2)
        e11 = gconv(x1 * x1)
        e22 = gconv(x2 * x2)
        e12 = gconv(x1 * x2)

        mu1_sq = mu1 * mu1
        mu2_sq = mu2 * mu2
        mu1_mu2 = mu1 * mu2
        sigma1_sq = e11 - mu1_sq
        sigma2_sq = e22 - mu2_sq
        sigma12 = e12 - mu1_mu2

        num = (2.0 * mu1_mu2 + _C1) * (2.0 * sigma12 + _C2)
        den = (mu1_sq + mu2_sq + _C1) * (sigma1_sq + sigma2_sq + _C2)
        ssim_map = num / den                          # f32

        # Per-(b, c, w) partial sums (reduce over H only); final mean happens in
        # the wrapper, so the batch grid axis stays fully independent.
        out_ref[0] = jnp.sum(ssim_map, axis=1)        # (C, W)

    return kernel


def _pick_vmem_limit_bytes() -> int:
    """Scoped-VMEM limit sized per TPU generation (~3/4 of physical VMEM)."""
    try:
        cap = int(pltpu.get_tpu_info().vmem_capacity_bytes)
        return min(cap * 3 // 4, 100 * 1024 * 1024)   # ~96-100 MiB v5e/v6e, ~48 MiB v7x
    except Exception:
        return 32 * 1024 * 1024                       # conservative, valid everywhere


def ssim_pallas(img1, img2, window_size: int = 11, size_average: bool = True,
                matmul_dtype=jnp.float32):
    assert img1.shape == img2.shape and img1.ndim == 4
    B, C, H, W = img1.shape

    # Band matrices pre-cast to the MXU operand dtype (bf16 on v6e/v7x for the
    # native fast MXU path; f32 default for bit-tight reference matching).
    ah = jnp.asarray(_band_matrix(H, window_size), dtype=matmul_dtype)       # (H, H)
    awt = jnp.asarray(_band_matrix(W, window_size).T, dtype=matmul_dtype)    # (W, W)

    # Advisory cost estimate: 5 separable convs (W- then H-direction matmuls).
    flops = int(B * (10 * C * H * W * (H + W) + 40 * C * H * W))
    itemsize = jnp.dtype(matmul_dtype).itemsize
    bytes_accessed = int(2 * B * C * H * W * 4 + B * C * W * 4
                         + (H * H + W * W) * itemsize)

    partial = pl.pallas_call(
        _make_ssim_kernel(C, H, W, matmul_dtype),
        out_shape=jax.ShapeDtypeStruct((B, C, W), jnp.float32),
        grid_spec=pltpu.PrefetchScalarGridSpec(
            num_scalar_prefetch=0,
            grid=(B,),
            in_specs=[
                pl.BlockSpec((1, C, H, W), lambda b: (b, 0, 0, 0)),
                pl.BlockSpec((1, C, H, W), lambda b: (b, 0, 0, 0)),
                pl.BlockSpec((H, H), lambda b: (0, 0)),
                pl.BlockSpec((W, W), lambda b: (0, 0)),
            ],
            out_specs=pl.BlockSpec((1, C, W), lambda b: (b, 0, 0)),
        ),
        compiler_params=pltpu.CompilerParams(
            # Batch axis is fully independent -> shardable across TCs (v7x megacore).
            dimension_semantics=("parallel",),
            vmem_limit_bytes=_pick_vmem_limit_bytes(),
        ),
        cost_estimate=pl.CostEstimate(
            flops=flops, transcendentals=0, bytes_accessed=bytes_accessed),
    )(img1, img2, ah, awt)

    if size_average:
        return jnp.sum(partial) / jnp.float32(B * C * H * W)
    # Per-batch mean over (C, H, W), matching ssim_map.mean(1).mean(1).mean(1).
    return jnp.sum(partial, axis=(1, 2)) / jnp.float32(C * H * W)


def ssim_reference(img1, img2, window_size: int = 11, size_average: bool = True):
    """Pure-JAX reference replicating PyTorch _ssim (grouped conv2d, 'same' pad)."""
    B, C, H, W = img1.shape
    pad = window_size // 2
    g = jnp.asarray(_gaussian_1d(window_size))
    w2d = jnp.outer(g, g)
    window = jnp.broadcast_to(w2d, (C, 1, window_size, window_size))

    def conv(x):
        return jax.lax.conv_general_dilated(
            x, window, window_strides=(1, 1),
            padding=[(pad, pad), (pad, pad)],
            dimension_numbers=("NCHW", "OIHW", "NCHW"),
            feature_group_count=C)

    mu1, mu2 = conv(img1), conv(img2)
    mu1_sq, mu2_sq, mu1_mu2 = mu1 * mu1, mu2 * mu2, mu1 * mu2
    sigma1_sq = conv(img1 * img1) - mu1_sq
    sigma2_sq = conv(img2 * img2) - mu2_sq
    sigma12 = conv(img1 * img2) - mu1_mu2
    ssim_map = ((2 * mu1_mu2 + _C1) * (2 * sigma12 + _C2)) / (
        (mu1_sq + mu2_sq + _C1) * (sigma1_sq + sigma2_sq + _C2))
    if size_average:
        return jnp.mean(ssim_map)
    return jnp.mean(ssim_map, axis=(1, 2, 3))


if __name__ == "__main__":
    key = jax.random.PRNGKey(0)
    k1, k2 = jax.random.split(key)
    B, C, H, W = 2, 3, 16, 16
    img1 = jax.random.uniform(k1, (B, C, H, W), dtype=jnp.float32)
    # Correlated second image -> SSIM well away from zero (meaningful rtol).
    img2 = jnp.clip(img1 + 0.05 * jax.random.normal(k2, (B, C, H, W), jnp.float32),
                    0.0, 1.0)

    # f32 MXU path, size_average=True (module default): tight check.
    out = jax.block_until_ready(jax.jit(lambda a, b: ssim_pallas(a, b))(img1, img2))
    ref = jax.block_until_ready(ssim_reference(img1, img2))
    np.testing.assert_allclose(np.asarray(out), np.asarray(ref), rtol=1e-4, atol=1e-5)

    # size_average=False (per-batch means).
    out_b = jax.block_until_ready(
        jax.jit(lambda a, b: ssim_pallas(a, b, size_average=False))(img1, img2))
    ref_b = jax.block_until_ready(ssim_reference(img1, img2, size_average=False))
    np.testing.assert_allclose(np.asarray(out_b), np.asarray(ref_b), rtol=1e-4, atol=1e-5)

    # bf16 MXU operands (native fast path on v6e/v7x), f32 accumulation: loose check.
    out_bf16 = jax.block_until_ready(
        jax.jit(lambda a, b: ssim_pallas(a, b, matmul_dtype=jnp.bfloat16))(img1, img2))
    np.testing.assert_allclose(np.asarray(out_bf16), np.asarray(ref),
                               rtol=5e-2, atol=5e-3)

    print("KERNEL_OK")
</pallas_src>

<mosaic_0001>
module attributes {stable_mosaic.version = 11 : i64} {
  func.func @kernel(%arg0: i32, %arg1: memref<1x3x16x16xf32, #tpu.memory_space<vmem>>, %arg2: memref<1x3x16x16xf32, #tpu.memory_space<vmem>>, %arg3: memref<16x16xf32, #tpu.memory_space<vmem>>, %arg4: memref<16x16xf32, #tpu.memory_space<vmem>>, %arg5: memref<1x3x16xf32, #tpu.memory_space<vmem>>) attributes {dimension_semantics = [#tpu.dimension_semantics<parallel>], iteration_bounds = array<i64: 2>, scalar_prefetch = 0 : i64, scratch_operands = 0 : i64, tpu.core_type = #tpu.core_type<tc>, window_params = [{transform_indices = @transform_0, window_bounds = array<i64: 1, 3, 16, 16>}, {transform_indices = @transform_1, window_bounds = array<i64: 1, 3, 16, 16>}, {pipeline_mode = #tpu.pipeline_mode<synchronous>, transform_indices = @transform_2, window_bounds = array<i64: 16, 16>}, {pipeline_mode = #tpu.pipeline_mode<synchronous>, transform_indices = @transform_3, window_bounds = array<i64: 16, 16>}, {transform_indices = @transform_4, window_bounds = array<i64: 1, 3, 16>}]} {
    %c0 = arith.constant 0 : index
    %c0_0 = arith.constant 0 : index
    %c0_1 = arith.constant 0 : index
    %c0_2 = arith.constant 0 : index
    %0 = vector.load %arg1[%c0, %c0_0, %c0_1, %c0_2] : memref<1x3x16x16xf32, #tpu.memory_space<vmem>>, vector<1x3x16x16xf32>
    %1 = vector.shape_cast %0 : vector<1x3x16x16xf32> to vector<3x16x16xf32>
    %c0_3 = arith.constant 0 : index
    %c0_4 = arith.constant 0 : index
    %c0_5 = arith.constant 0 : index
    %c0_6 = arith.constant 0 : index
    %2 = vector.load %arg2[%c0_3, %c0_4, %c0_5, %c0_6] : memref<1x3x16x16xf32, #tpu.memory_space<vmem>>, vector<1x3x16x16xf32>
    %3 = vector.shape_cast %2 : vector<1x3x16x16xf32> to vector<3x16x16xf32>
    %c0_7 = arith.constant 0 : index
    %c0_8 = arith.constant 0 : index
    %4 = vector.load %arg3[%c0_7, %c0_8] : memref<16x16xf32, #tpu.memory_space<vmem>>, vector<16x16xf32>
    %c0_9 = arith.constant 0 : index
    %c0_10 = arith.constant 0 : index
    %5 = vector.load %arg4[%c0_9, %c0_10] : memref<16x16xf32, #tpu.memory_space<vmem>>, vector<16x16xf32>
    %6 = vector.shape_cast %1 : vector<3x16x16xf32> to vector<48x16xf32>
    %cst = arith.constant dense<0.000000e+00> : vector<48x16xf32>
    %7 = tpu.matmul %6, %5, %cst {dimension_numbers = #tpu.dot_dimension_numbers<[1], [0], [0], [1], [0, 0, 1, 1], [], []>} : vector<48x16xf32>, vector<16x16xf32>, vector<48x16xf32> -> vector<48x16xf32>
    %8 = vector.shape_cast %7 : vector<48x16xf32> to vector<3x16x16xf32>
    %9 = vector.extract_strided_slice %8 {offsets = [0, 0, 0], sizes = [1, 16, 16], strides = [1, 1, 1]} : vector<3x16x16xf32> to vector<1x16x16xf32>
    %10 = vector.shape_cast %9 : vector<1x16x16xf32> to vector<16x16xf32>
    %cst_11 = arith.constant dense<0.000000e+00> : vector<16x16xf32>
    %11 = tpu.matmul %4, %10, %cst_11 {dimension_numbers = #tpu.dot_dimension_numbers<[1], [0], [0], [1], [0, 0, 1, 1], [], []>} : vector<16x16xf32>, vector<16x16xf32>, vector<16x16xf32> -> vector<16x16xf32>
    %12 = vector.extract_strided_slice %8 {offsets = [1, 0, 0], sizes = [1, 16, 16], strides = [1, 1, 1]} : vector<3x16x16xf32> to vector<1x16x16xf32>
    %13 = vector.shape_cast %12 : vector<1x16x16xf32> to vector<16x16xf32>
    %cst_12 = arith.constant dense<0.000000e+00> : vector<16x16xf32>
    %14 = tpu.matmul %4, %13, %cst_12 {dimension_numbers = #tpu.dot_dimension_numbers<[1], [0], [0], [1], [0, 0, 1, 1], [], []>} : vector<16x16xf32>, vector<16x16xf32>, vector<16x16xf32> -> vector<16x16xf32>
    %15 = vector.extract_strided_slice %8 {offsets = [2, 0, 0], sizes = [1, 16, 16], strides = [1, 1, 1]} : vector<3x16x16xf32> to vector<1x16x16xf32>
    %16 = vector.shape_cast %15 : vector<1x16x16xf32> to vector<16x16xf32>
    %cst_13 = arith.constant dense<0.000000e+00> : vector<16x16xf32>
    %17 = tpu.matmul %4, %16, %cst_13 {dimension_numbers = #tpu.dot_dimension_numbers<[1], [0], [0], [1], [0, 0, 1, 1], [], []>} : vector<16x16xf32>, vector<16x16xf32>, vector<16x16xf32> -> vector<16x16xf32>
    %18 = vector.shape_cast %11 : vector<16x16xf32> to vector<1x16x16xf32>
    %19 = vector.shape_cast %14 : vector<16x16xf32> to vector<1x16x16xf32>
    %20 = vector.shape_cast %17 : vector<16x16xf32> to vector<1x16x16xf32>
    %21 = tpu.concatenate %18, %19, %20 in 0 : vector<1x16x16xf32>, vector<1x16x16xf32>, vector<1x16x16xf32> -> vector<3x16x16xf32>
    %22 = vector.shape_cast %3 : vector<3x16x16xf32> to vector<48x16xf32>
    %cst_14 = arith.constant dense<0.000000e+00> : vector<48x16xf32>
    %23 = tpu.matmul %22, %5, %cst_14 {dimension_numbers = #tpu.dot_dimension_numbers<[1], [0], [0], [1], [0, 0, 1, 1], [], []>} : vector<48x16xf32>, vector<16x16xf32>, vector<48x16xf32> -> vector<48x16xf32>
    %24 = vector.shape_cast %23 : vector<48x16xf32> to vector<3x16x16xf32>
    %25 = vector.extract_strided_slice %24 {offsets = [0, 0, 0], sizes = [1, 16, 16], strides = [1, 1, 1]} : vector<3x16x16xf32> to vector<1x16x16xf32>
    %26 = vector.shape_cast %25 : vector<1x16x16xf32> to vector<16x16xf32>
    %cst_15 = arith.constant dense<0.000000e+00> : vector<16x16xf32>
    %27 = tpu.matmul %4, %26, %cst_15 {dimension_numbers = #tpu.dot_dimension_numbers<[1], [0], [0], [1], [0, 0, 1, 1], [], []>} : vector<16x16xf32>, vector<16x16xf32>, vector<16x16xf32> -> vector<16x16xf32>
    %28 = vector.extract_strided_slice %24 {offsets = [1, 0, 0], sizes = [1, 16, 16], strides = [1, 1, 1]} : vector<3x16x16xf32> to vector<1x16x16xf32>
    %29 = vector.shape_cast %28 : vector<1x16x16xf32> to vector<16x16xf32>
    %cst_16 = arith.constant dense<0.000000e+00> : vector<16x16xf32>
    %30 = tpu.matmul %4, %29, %cst_16 {dimension_numbers = #tpu.dot_dimension_numbers<[1], [0], [0], [1], [0, 0, 1, 1], [], []>} : vector<16x16xf32>, vector<16x16xf32>, vector<16x16xf32> -> vector<16x16xf32>
    %31 = vector.extract_strided_slice %24 {offsets = [2, 0, 0], sizes = [1, 16, 16], strides = [1, 1, 1]} : vector<3x16x16xf32> to vector<1x16x16xf32>
    %32 = vector.shape_cast %31 : vector<1x16x16xf32> to vector<16x16xf32>
    %cst_17 = arith.constant dense<0.000000e+00> : vector<16x16xf32>
    %33 = tpu.matmul %4, %32, %cst_17 {dimension_numbers = #tpu.dot_dimension_numbers<[1], [0], [0], [1], [0, 0, 1, 1], [], []>} : vector<16x16xf32>, vector<16x16xf32>, vector<16x16xf32> -> vector<16x16xf32>
    %34 = vector.shape_cast %27 : vector<16x16xf32> to vector<1x16x16xf32>
    %35 = vector.shape_cast %30 : vector<16x16xf32> to vector<1x16x16xf32>
    %36 = vector.shape_cast %33 : vector<16x16xf32> to vector<1x16x16xf32>
    %37 = tpu.concatenate %34, %35, %36 in 0 : vector<1x16x16xf32>, vector<1x16x16xf32>, vector<1x16x16xf32> -> vector<3x16x16xf32>
    %38 = arith.mulf %1, %1 : vector<3x16x16xf32>
    %39 = vector.shape_cast %38 : vector<3x16x16xf32> to vector<48x16xf32>
    %cst_18 = arith.constant dense<0.000000e+00> : vector<48x16xf32>
    %40 = tpu.matmul %39, %5, %cst_18 {dimension_numbers = #tpu.dot_dimension_numbers<[1], [0], [0], [1], [0, 0, 1, 1], [], []>} : vector<48x16xf32>, vector<16x16xf32>, vector<48x16xf32> -> vector<48x16xf32>
    %41 = vector.shape_cast %40 : vector<48x16xf32> to vector<3x16x16xf32>
    %42 = vector.extract_strided_slice %41 {offsets = [0, 0, 0], sizes = [1, 16, 16], strides = [1, 1, 1]} : vector<3x16x16xf32> to vector<1x16x16xf32>
    %43 = vector.shape_cast %42 : vector<1x16x16xf32> to vector<16x16xf32>
    %cst_19 = arith.constant dense<0.000000e+00> : vector<16x16xf32>
    %44 = tpu.matmul %4, %43, %cst_19 {dimension_numbers = #tpu.dot_dimension_numbers<[1], [0], [0], [1], [0, 0, 1, 1], [], []>} : vector<16x16xf32>, vector<16x16xf32>, vector<16x16xf32> -> vector<16x16xf32>
    %45 = vector.extract_strided_slice %41 {offsets = [1, 0, 0], sizes = [1, 16, 16], strides = [1, 1, 1]} : vector<3x16x16xf32> to vector<1x16x16xf32>
    %46 = vector.shape_cast %45 : vector<1x16x16xf32> to vector<16x16xf32>
    %cst_20 = arith.constant dense<0.000000e+00> : vector<16x16xf32>
    %47 = tpu.matmul %4, %46, %cst_20 {dimension_numbers = #tpu.dot_dimension_numbers<[1], [0], [0], [1], [0, 0, 1, 1], [], []>} : vector<16x16xf32>, vector<16x16xf32>, vector<16x16xf32> -> vector<16x16xf32>
    %48 = vector.extract_strided_slice %41 {offsets = [2, 0, 0], sizes = [1, 16, 16], strides = [1, 1, 1]} : vector<3x16x16xf32> to vector<1x16x16xf32>
    %49 = vector.shape_cast %48 : vector<1x16x16xf32> to vector<16x16xf32>
    %cst_21 = arith.constant dense<0.000000e+00> : vector<16x16xf32>
    %50 = tpu.matmul %4, %49, %cst_21 {dimension_numbers = #tpu.dot_dimension_numbers<[1], [0], [0], [1], [0, 0, 1, 1], [], []>} : vector<16x16xf32>, vector<16x16xf32>, vector<16x16xf32> -> vector<16x16xf32>
    %51 = vector.shape_cast %44 : vector<16x16xf32> to vector<1x16x16xf32>
    %52 = vector.shape_cast %47 : vector<16x16xf32> to vector<1x16x16xf32>
    %53 = vector.shape_cast %50 : vector<16x16xf32> to vector<1x16x16xf32>
    %54 = tpu.concatenate %51, %52, %53 in 0 : vector<1x16x16xf32>, vector<1x16x16xf32>, vector<1x16x16xf32> -> vector<3x16x16xf32>
    %55 = arith.mulf %3, %3 : vector<3x16x16xf32>
    %56 = vector.shape_cast %55 : vector<3x16x16xf32> to vector<48x16xf32>
    %cst_22 = arith.constant dense<0.000000e+00> : vector<48x16xf32>
    %57 = tpu.matmul %56, %5, %cst_22 {dimension_numbers = #tpu.dot_dimension_numbers<[1], [0], [0], [1], [0, 0, 1, 1], [], []>} : vector<48x16xf32>, vector<16x16xf32>, vector<48x16xf32> -> vector<48x16xf32>
    %58 = vector.shape_cast %57 : vector<48x16xf32> to vector<3x16x16xf32>
    %59 = vector.extract_strided_slice %58 {offsets = [0, 0, 0], sizes = [1, 16, 16], strides = [1, 1, 1]} : vector<3x16x16xf32> to vector<1x16x16xf32>
    %60 = vector.shape_cast %59 : vector<1x16x16xf32> to vector<16x16xf32>
    %cst_23 = arith.constant dense<0.000000e+00> : vector<16x16xf32>
    %61 = tpu.matmul %4, %60, %cst_23 {dimension_numbers = #tpu.dot_dimension_numbers<[1], [0], [0], [1], [0, 0, 1, 1], [], []>} : vector<16x16xf32>, vector<16x16xf32>, vector<16x16xf32> -> vector<16x16xf32>
    %62 = vector.extract_strided_slice %58 {offsets = [1, 0, 0], sizes = [1, 16, 16], strides = [1, 1, 1]} : vector<3x16x16xf32> to vector<1x16x16xf32>
    %63 = vector.shape_cast %62 : vector<1x16x16xf32> to vector<16x16xf32>
    %cst_24 = arith.constant dense<0.000000e+00> : vector<16x16xf32>
    %64 = tpu.matmul %4, %63, %cst_24 {dimension_numbers = #tpu.dot_dimension_numbers<[1], [0], [0], [1], [0, 0, 1, 1], [], []>} : vector<16x16xf32>, vector<16x16xf32>, vector<16x16xf32> -> vector<16x16xf32>
    %65 = vector.extract_strided_slice %58 {offsets = [2, 0, 0], sizes = [1, 16, 16], strides = [1, 1, 1]} : vector<3x16x16xf32> to vector<1x16x16xf32>
    %66 = vector.shape_cast %65 : vector<1x16x16xf32> to vector<16x16xf32>
    %cst_25 = arith.constant dense<0.000000e+00> : vector<16x16xf32>
    %67 = tpu.matmul %4, %66, %cst_25 {dimension_numbers = #tpu.dot_dimension_numbers<[1], [0], [0], [1], [0, 0, 1, 1], [], []>} : vector<16x16xf32>, vector<16x16xf32>, vector<16x16xf32> -> vector<16x16xf32>
    %68 = vector.shape_cast %61 : vector<16x16xf32> to vector<1x16x16xf32>
    %69 = vector.shape_cast %64 : vector<16x16xf32> to vector<1x16x16xf32>
    %70 = vector.shape_cast %67 : vector<16x16xf32> to vector<1x16x16xf32>
    %71 = tpu.concatenate %68, %69, %70 in 0 : vector<1x16x16xf32>, vector<1x16x16xf32>, vector<1x16x16xf32> -> vector<3x16x16xf32>
    %72 = arith.mulf %1, %3 : vector<3x16x16xf32>
    %73 = vector.shape_cast %72 : vector<3x16x16xf32> to vector<48x16xf32>
    %cst_26 = arith.constant dense<0.000000e+00> : vector<48x16xf32>
    %74 = tpu.matmul %73, %5, %cst_26 {dimension_numbers = #tpu.dot_dimension_numbers<[1], [0], [0], [1], [0, 0, 1, 1], [], []>} : vector<48x16xf32>, vector<16x16xf32>, vector<48x16xf32> -> vector<48x16xf32>
    %75 = vector.shape_cast %74 : vector<48x16xf32> to vector<3x16x16xf32>
    %76 = vector.extract_strided_slice %75 {offsets = [0, 0, 0], sizes = [1, 16, 16], strides = [1, 1, 1]} : vector<3x16x16xf32> to vector<1x16x16xf32>
    %77 = vector.shape_cast %76 : vector<1x16x16xf32> to vector<16x16xf32>
    %cst_27 = arith.constant dense<0.000000e+00> : vector<16x16xf32>
    %78 = tpu.matmul %4, %77, %cst_27 {dimension_numbers = #tpu.dot_dimension_numbers<[1], [0], [0], [1], [0, 0, 1, 1], [], []>} : vector<16x16xf32>, vector<16x16xf32>, vector<16x16xf32> -> vector<16x16xf32>
    %79 = vector.extract_strided_slice %75 {offsets = [1, 0, 0], sizes = [1, 16, 16], strides = [1, 1, 1]} : vector<3x16x16xf32> to vector<1x16x16xf32>
    %80 = vector.shape_cast %79 : vector<1x16x16xf32> to vector<16x16xf32>
    %cst_28 = arith.constant dense<0.000000e+00> : vector<16x16xf32>
    %81 = tpu.matmul %4, %80, %cst_28 {dimension_numbers = #tpu.dot_dimension_numbers<[1], [0], [0], [1], [0, 0, 1, 1], [], []>} : vector<16x16xf32>, vector<16x16xf32>, vector<16x16xf32> -> vector<16x16xf32>
    %82 = vector.extract_strided_slice %75 {offsets = [2, 0, 0], sizes = [1, 16, 16], strides = [1, 1, 1]} : vector<3x16x16xf32> to vector<1x16x16xf32>
    %83 = vector.shape_cast %82 : vector<1x16x16xf32> to vector<16x16xf32>
    %cst_29 = arith.constant dense<0.000000e+00> : vector<16x16xf32>
    %84 = tpu.matmul %4, %83, %cst_29 {dimension_numbers = #tpu.dot_dimension_numbers<[1], [0], [0], [1], [0, 0, 1, 1], [], []>} : vector<16x16xf32>, vector<16x16xf32>, vector<16x16xf32> -> vector<16x16xf32>
    %85 = vector.shape_cast %78 : vector<16x16xf32> to vector<1x16x16xf32>
    %86 = vector.shape_cast %81 : vector<16x16xf32> to vector<1x16x16xf32>
    %87 = vector.shape_cast %84 : vector<16x16xf32> to vector<1x16x16xf32>
    %88 = tpu.concatenate %85, %86, %87 in 0 : vector<1x16x16xf32>, vector<1x16x16xf32>, vector<1x16x16xf32> -> vector<3x16x16xf32>
    %89 = arith.mulf %21, %21 : vector<3x16x16xf32>
    %90 = arith.mulf %37, %37 : vector<3x16x16xf32>
    %91 = arith.mulf %21, %37 : vector<3x16x16xf32>
    %92 = arith.subf %54, %89 : vector<3x16x16xf32>
    %93 = arith.subf %71, %90 : vector<3x16x16xf32>
    %94 = arith.subf %88, %91 : vector<3x16x16xf32>
    %cst_30 = arith.constant 2.000000e+00 : f32
    %95 = vector.broadcast %cst_30 : f32 to vector<3x16x16xf32>
    %96 = arith.mulf %95, %91 : vector<3x16x16xf32>
    %cst_31 = arith.constant 9.99999974E-5 : f32
    %97 = vector.broadcast %cst_31 : f32 to vector<3x16x16xf32>
    %98 = arith.addf %96, %97 : vector<3x16x16xf32>
    %cst_32 = arith.constant 2.000000e+00 : f32
    %99 = vector.broadcast %cst_32 : f32 to vector<3x16x16xf32>
    %100 = arith.mulf %99, %94 : vector<3x16x16xf32>
    %cst_33 = arith.constant 8.99999984E-4 : f32
    %101 = vector.broadcast %cst_33 : f32 to vector<3x16x16xf32>
    %102 = arith.addf %100, %101 : vector<3x16x16xf32>
    %103 = arith.mulf %98, %102 : vector<3x16x16xf32>
    %104 = arith.addf %89, %90 : vector<3x16x16xf32>
    %cst_34 = arith.constant 9.99999974E-5 : f32
    %105 = vector.broadcast %cst_34 : f32 to vector<3x16x16xf32>
    %106 = arith.addf %104, %105 : vector<3x16x16xf32>
    %107 = arith.addf %92, %93 : vector<3x16x16xf32>
    %cst_35 = arith.constant 8.99999984E-4 : f32
    %108 = vector.broadcast %cst_35 : f32 to vector<3x16x16xf32>
    %109 = arith.addf %107, %108 : vector<3x16x16xf32>
    %110 = arith.mulf %106, %109 : vector<3x16x16xf32>
    %111 = arith.divf %103, %110 : vector<3x16x16xf32>
    %cst_36 = arith.constant dense<0.000000e+00> : vector<3x16xf32>
    %112 = vector.multi_reduction <add>, %111, %cst_36 [1] : vector<3x16x16xf32> to vector<3x16xf32>
    %c0_37 = arith.constant 0 : index
    %c0_38 = arith.constant 0 : index
    %c0_39 = arith.constant 0 : index
    %113 = vector.load %arg5[%c0_37, %c0_38, %c0_39] : memref<1x3x16xf32, #tpu.memory_space<vmem>>, vector<1x3x16xf32>
    %114 = vector.shape_cast %113 : vector<1x3x16xf32> to vector<3x16xf32>
    %115 = vector.shape_cast %112 : vector<3x16xf32> to vector<1x3x16xf32>
    tpu.vector_store %arg5[%c0_37, %c0_38, %c0_39], %115 {strides = array<i32>} : memref<1x3x16xf32, #tpu.memory_space<vmem>>, vector<1x3x16xf32>,
    return
  }
  func.func @transform_0(%arg0: i32) -> (i32, i32, i32, i32) {
    %c0_i32 = arith.constant 0 : i32
    %c0_i32_0 = arith.constant 0 : i32
    %c0_i32_1 = arith.constant 0 : i32
    %c0_i32_2 = arith.constant 0 : i32
    return %arg0, %c0_i32, %c0_i32_0, %c0_i32_1 : i32, i32, i32, i32
  }
  func.func @transform_1(%arg0: i32) -> (i32, i32, i32, i32) {
    %c0_i32 = arith.constant 0 : i32
    %c0_i32_0 = arith.constant 0 : i32
    %c0_i32_1 = arith.constant 0 : i32
    %c0_i32_2 = arith.constant 0 : i32
    return %arg0, %c0_i32, %c0_i32_0, %c0_i32_1 : i32, i32, i32, i32
  }
  func.func @transform_2(%arg0: i32) -> (i32, i32) {
    %c0_i32 = arith.constant 0 : i32
    %c0_i32_0 = arith.constant 0 : i32
    %c0_i32_1 = arith.constant 0 : i32
    return %c0_i32, %c0_i32_0 : i32, i32
  }
  func.func @transform_3(%arg0: i32) -> (i32, i32) {
    %c0_i32 = arith.constant 0 : i32
    %c0_i32_0 = arith.constant 0 : i32
    %c0_i32_1 = arith.constant 0 : i32
    return %c0_i32, %c0_i32_0 : i32, i32
  }
  func.func @transform_4(%arg0: i32) -> (i32, i32, i32) {
    %c0_i32 = arith.constant 0 : i32
    %c0_i32_0 = arith.constant 0 : i32
    %c0_i32_1 = arith.constant 0 : i32
    return %arg0, %c0_i32, %c0_i32_0 : i32, i32, i32
  }
}

</mosaic_0001>

<llo_original>
// kernel: _lambda_.1
$region0: #{_lambda_.1}
  #allocation0 [shape = 'u32[]', space=smem, size = 0x4, offset = 0x4, fixed_abs, tag = 'smem constant byte address 0x4 - core index']
  #allocation1 [shape = 'u32[144,128]{1,0:T(1,128)}', space=vmem, size = 0x12000, scoped, tag = 'internal scratch']
  %s0 = inlined_call_operand.hbm [shape: f32[2,3,16,16], index: 0, kind: input, shape index: {}]
  %s1 = inlined_call_operand.hbm [shape: f32[2,3,16,16], index: 1, kind: input, shape index: {}]
  %s2 = inlined_call_operand.hbm [shape: f32[16,16], index: 2, kind: input, shape index: {}, may-alias: {2,3}]
  %s3 = inlined_call_operand.hbm [shape: f32[16,16], index: 3, kind: input, shape index: {}, may-alias: {2,3}]
  %s4 = inlined_call_operand.vmem [shape: f32[2,3,16], index: 4, kind: output, shape index: {}]
  %s5 = sld [smem:[#allocation0]]
  $region65: #{_lambda_.1} parent=0
    _
  %s7 = ssub.s32 1, %s5
  %s8 = scalar_select 0, %s7, %s5
  $region1: #{_lambda_.1} parent=0
    #allocation2 [shape = 'u8[49152]{0}', space=vmem, size = 0xc000, scoped, tag = 'input window, operand 0']
    #allocation3 [shape = 's32[2]{0}', space=sflag, size = 0x8, scoped, tag = 'scoped memory for _lambda_.1']
    #allocation4 [shape = 'u8[49152]{0}', space=vmem, size = 0xc000, scoped, tag = 'input window, operand 1']
    #allocation5 [shape = 's32[2]{0}', space=sflag, size = 0x8, scoped, tag = 'scoped memory for _lambda_.1']
    #allocation6 [shape = 'u8[8192]{0}', space=vmem, size = 0x2000, scoped, tag = 'input window, operand 2, single buffered']
    #allocation7 [shape = 'u8[8192]{0}', space=vmem, size = 0x2000, scoped, tag = 'input window, operand 3, single buffered']
    #allocation8 [shape = 's32[1]{0}', space=sflag, size = 0x4, scoped, tag = 'scoped memory for _lambda_.1']
    %9 = vsyncpa [#allocation3], 0
    %s10 = scalar_lea.sflag [#allocation3], 1
    %11 = vsyncpa %s10, 0
    %12 = vsyncpa [#allocation5], 0
    %s13 = scalar_lea.sflag [#allocation5], 1
    %14 = vsyncpa %s13, 0
    %15 = vsyncpa [#allocation8], 0
    loop: start=0, step=1, limit=4
    $region2: #{_lambda_.1} parent=1 // loop_pre_header
      _
    $region3: #{_lambda_.1} parent=1 // loop_header
      %s17 = sphi 0, %s21
      %p18 = scmp.ge.s32.totalorder %s17, 4
      %s27 = sphi 0, %s29
      %s30 = sphi 0, %s27
      %s31 = sphi 0, %s30
      %s47 = sphi 0, %s31
      %s53 = sphi 0, %s55
      %s56 = sphi 0, %s53
      %s57 = sphi 0, %s56
      %s73 = sphi 0, %s57
      %s77 = sphi 0, %s77
      %s79 = sphi 0, %s77
      %s80 = sphi 0, %s79
      %s94 = sphi 0, %s80
      %s98 = sphi 0, %s98
      %s100 = sphi 0, %s98
      %s101 = sphi 0, %s100
      %s115 = sphi 0, %s101
      %s121 = sphi 0, %s123
      %s124 = sphi 0, %s121
      %s125 = sphi 0, %s124
      %s141 = sphi 0, %s125
    $region4: #{_lambda_.1} parent=1 // loop_header_branch
      %20 = sbr.rel (%p18) target = $region8
    $region5: #{_lambda_.1} parent=1 // loop_body
      %s22 = ssub.s32 %s17, 1
      %s23 = ssub.s32 %s17, 2
      %s24 = sadd.s32 %s17, 1
      %s25 = ssub.s32 %s17, %s24
      %p26 = scmp.eq.s32.totalorder %s25, 0
      %s28 = sadd.s32 %s27, 1
      %s29 = scalar_select %p26, %s27, %s28
      %p32 = pneg %p26
      %p33 = scmp.eq.s32.totalorder %s17, 1
      %p34 = por %p32, %p33
      %p35 = scmp.ne.s32.totalorder %s27, %s30
      %p36 = scmp.eq.s32.totalorder %s17, 0
      %p37 = por %p35, %p36
      %p38 = scmp.ne.s32.totalorder %s27, %s30
      %p39 = scmp.eq.s32.totalorder %s22, 1
      %p40 = por %p38, %p39
      %p41 = scmp.ne.s32.totalorder %s30, %s31
      %p42 = scmp.eq.s32.totalorder %s22, 0
      %p43 = por %p41, %p42
      %p44 = scmp.ne.s32.totalorder %s30, %s31
      %p45 = scmp.eq.s32.totalorder %s23, 1
      %p46 = por %p44, %p45
      %p48 = scmp.ne.s32.totalorder %s31, %s47
      %p49 = scmp.eq.s32.totalorder %s23, 0
      %p50 = por %p48, %p49
      %s51 = ssub.s32 %s17, %s24
      %p52 = scmp.eq.s32.totalorder %s51, 0
      %s54 = sadd.s32 %s53, 1
      %s55 = scalar_select %p52, %s53, %s54
      %p58 = pneg %p52
      %p59 = scmp.eq.s32.totalorder %s17, 1
      %p60 = por %p58, %p59
      %p61 = scmp.ne.s32.totalorder %s53, %s56
      %p62 = scmp.eq.s32.totalorder %s17, 0
      %p63 = por %p61, %p62
      %p64 = scmp.ne.s32.totalorder %s53, %s56
      %p65 = scmp.eq.s32.totalorder %s22, 1
      %p66 = por %p64, %p65
      %p67 = scmp.ne.s32.totalorder %s56, %s57
      %p68 = scmp.eq.s32.totalorder %s22, 0
      %p69 = por %p67, %p68
      %p70 = scmp.ne.s32.totalorder %s56, %s57
      %p71 = scmp.eq.s32.totalorder %s23, 1
      %p72 = por %p70, %p71
      %p74 = scmp.ne.s32.totalorder %s57, %s73
      %p75 = scmp.eq.s32.totalorder %s23, 0
      %p76 = por %p74, %p75
      %s78 = sadd.s32 %s77, 1
      %p81 = scmp.eq.s32.totalorder %s17, 1
      %p82 = scmp.ne.s32.totalorder %s77, %s79
      %p83 = scmp.eq.s32.totalorder %s17, 0
      %p84 = por %p82, %p83
      %p85 = scmp.ne.s32.totalorder %s77, %s79
      %p86 = scmp.eq.s32.totalorder %s22, 1
      %p87 = por %p85, %p86
      %p88 = scmp.ne.s32.totalorder %s79, %s80
      %p89 = scmp.eq.s32.totalorder %s22, 0
      %p90 = por %p88, %p89
      %p91 = scmp.ne.s32.totalorder %s79, %s80
      %p92 = scmp.eq.s32.totalorder %s23, 1
      %p93 = por %p91, %p92
      %p95 = scmp.ne.s32.totalorder %s80, %s94
      %p96 = scmp.eq.s32.totalorder %s23, 0
      %p97 = por %p95, %p96
      %s99 = sadd.s32 %s98, 1
      %p102 = scmp.eq.s32.totalorder %s17, 1
      %p103 = scmp.ne.s32.totalorder %s98, %s100
      %p104 = scmp.eq.s32.totalorder %s17, 0
      %p105 = por %p103, %p104
      %p106 = scmp.ne.s32.totalorder %s98, %s100
      %p107 = scmp.eq.s32.totalorder %s22, 1
      %p108 = por %p106, %p107
      %p109 = scmp.ne.s32.totalorder %s100, %s101
      %p110 = scmp.eq.s32.totalorder %s22, 0
      %p111 = por %p109, %p110
      %p112 = scmp.ne.s32.totalorder %s100, %s101
      %p113 = scmp.eq.s32.totalorder %s23, 1
      %p114 = por %p112, %p113
      %p116 = scmp.ne.s32.totalorder %s101, %s115
      %p117 = scmp.eq.s32.totalorder %s23, 0
      %p118 = por %p116, %p117
      %s119 = ssub.s32 %s17, %s24
      %p120 = scmp.eq.s32.totalorder %s119, 0
      %s122 = sadd.s32 %s121, 1
      %s123 = scalar_select %p120, %s121, %s122
      %p126 = pneg %p120
      %p127 = scmp.eq.s32.totalorder %s17, 1
      %p128 = por %p126, %p127
      %p129 = scmp.ne.s32.totalorder %s121, %s124
      %p130 = scmp.eq.s32.totalorder %s17, 0
      %p131 = por %p129, %p130
      %p132 = scmp.ne.s32.totalorder %s121, %s124
      %p133 = scmp.eq.s32.totalorder %s22, 1
      %p134 = por %p132, %p133
      %p135 = scmp.ne.s32.totalorder %s124, %s125
      %p136 = scmp.eq.s32.totalorder %s22, 0
      %p137 = por %p135, %p136
      %p138 = scmp.ne.s32.totalorder %s124, %s125
      %p139 = scmp.eq.s32.totalorder %s23, 1
      %p140 = por %p138, %p139
      %p142 = scmp.ne.s32.totalorder %s125, %s141
      %p143 = scmp.eq.s32.totalorder %s23, 0
      %p144 = por %p142, %p143
      %p145 = scmp.le.s32.totalorder 1, %s17
      %p146 = scmp.lt.s32.totalorder %s17, 3
      %p147 = pnand %p145, %p146
      %p148 = pneg %p147
      // Predicated region
      $region9: #{_lambda_.1} parent=5 // pred_check
        _
      $region10: #{_lambda_.1} parent=5 // pred_check_branch
        %150 = sbr.rel (%p147) target = $region12
      $region11: #{_lambda_.1} parent=5 // pred_region
        %s151 = ssub.s32 %s17, 1
        // Predicated region
        $region13: #{_lambda_.1} parent=11 // pred_check
          %p152 = pneg %p90
        $region14: #{_lambda_.1} parent=11 // pred_check_branch
          %154 = sbr.rel (%p152) target = $region16
        $region15: #{_lambda_.1} parent=11 // pred_region
          %s156 = ssub.s32 256, 256
          %157 = vsyncadd [#allocation5], %s156
          %s158 = sshll.u32 [#allocation6], 4
          %s159 = int_to_ptr.vmem [resolvable:$true] %s158
          %164 = dma.hbm_to_vmem [thread:$0]  %s2, 256, %s159, [#allocation5], 128, 128, 8
        $region16: #{_lambda_.1} parent=11 // pred_fallthru
          _
        // Predicated region
        $region17: #{_lambda_.1} parent=11 // pred_check
          %p165 = pneg %p111
        $region18: #{_lambda_.1} parent=11 // pred_check_branch
          %167 = sbr.rel (%p165) target = $region20
        $region19: #{_lambda_.1} parent=11 // pred_region
          %s169 = ssub.s32 256, 256
          %170 = vsyncadd [#allocation8], %s169
          %s171 = sshll.u32 [#allocation7], 4
          %s172 = int_to_ptr.vmem [resolvable:$true] %s171
          %177 = dma.hbm_to_vmem [thread:$0]  %s3, 256, %s172, [#allocation8], 128, 128, 8
        $region20: #{_lambda_.1} parent=11 // pred_fallthru
          _
      $region12: #{_lambda_.1} parent=5 // pred_fallthru
        _
      %p178 = scmp.lt.s32.totalorder %s17, 2
      // Predicated region
      $region21: #{_lambda_.1} parent=5 // pred_check
        %p179 = pneg %p178
      $region22: #{_lambda_.1} parent=5 // pred_check_branch
        %181 = sbr.rel (%p179) target = $region24
      $region23: #{_lambda_.1} parent=5 // pred_region
        // Predicated region
        $region25: #{_lambda_.1} parent=23 // pred_check
          %p182 = pneg %p37
        $region26: #{_lambda_.1} parent=23 // pred_check_branch
          %184 = sbr.rel (%p182) target = $region28
        $region27: #{_lambda_.1} parent=23 // pred_region
          %s185 = sand.u32 %s27, 1
          %s186 = scalar_lea.sflag [#allocation3], %s185
          %s187 = sand.u32 %s27, 1
          %s188 = smul.addr %s187, 48
          %s189 = scalar_lea.vmem [#allocation2], %s188
          %s191 = ssub.s32 768, 768
          %192 = vsyncadd %s186, %s191
          %s193 = smul.addr %s17, 6
          %s194 = smul.addr %s193, 128
          %s195 = scalar_lea.hbm %s0, %s194
          %s196 = sshll.u32 %s189, 4
          %s197 = int_to_ptr.vmem [resolvable:$true] %s196
          %202 = dma.hbm_to_vmem [thread:$0]  %s195, 768, %s197, %s186, 128, 128, 8
        $region28: #{_lambda_.1} parent=23 // pred_fallthru
          _
        // Predicated region
        $region29: #{_lambda_.1} parent=23 // pred_check
          %p203 = pneg %p63
        $region30: #{_lambda_.1} parent=23 // pred_check_branch
          %205 = sbr.rel (%p203) target = $region32
        $region31: #{_lambda_.1} parent=23 // pred_region
          %s206 = sand.u32 %s17, 1
          %s207 = scalar_lea.sflag [#allocation5], %s206
          %s208 = sand.u32 %s53, 1
          %s209 = smul.addr %s208, 48
          %s210 = scalar_lea.vmem [#allocation4], %s209
          %s212 = ssub.s32 768, 768
          %213 = vsyncadd %s207, %s212
          %s214 = smul.addr %s17, 6
          %s215 = smul.addr %s214, 128
          %s216 = scalar_lea.hbm %s1, %s215
          %s217 = sshll.u32 %s210, 4
          %s218 = int_to_ptr.vmem [resolvable:$true] %s217
          %223 = dma.hbm_to_vmem [thread:$0]  %s216, 768, %s218, %s207, 128, 128, 8
        $region32: #{_lambda_.1} parent=23 // pred_fallthru
          _
      $region24: #{_lambda_.1} parent=5 // pred_fallthru
        _
      %p224 = scmp.le.s32.totalorder 1, %s17
      %p225 = scmp.lt.s32.totalorder %s17, 3
      %p226 = pnand %p224, %p225
      %p227 = pneg %p226
      // Predicated region
      $region33: #{_lambda_.1} parent=5 // pred_check
        _
      $region34: #{_lambda_.1} parent=5 // pred_check_branch
        %229 = sbr.rel (%p226) target = $region36
      $region35: #{_lambda_.1} parent=5 // pred_region
        %s230 = ssub.s32 %s17, 1
        %s231 = sand.u32 %s30, 1
        %s232 = scalar_lea.sflag [#allocation3], %s231
        %s233 = sand.u32 %s30, 1
        %s234 = smul.addr %s233, 48
        %s235 = scalar_lea.vmem [#allocation2], %s234
        // Predicated region
        $region37: #{_lambda_.1} parent=35 // pred_check
          %p236 = pneg %p43
        $region38: #{_lambda_.1} parent=35 // pred_check_branch
          %238 = sbr.rel (%p236) target = $region40
        $region39: #{_lambda_.1} parent=35 // pred_region
          %239 = dma.done %s232, 768
        $region40: #{_lambda_.1} parent=35 // pred_fallthru
          _
        %s240 = sand.u32 %s22, 1
        %s241 = scalar_lea.sflag [#allocation5], %s240
        %s242 = sand.u32 %s56, 1
        %s243 = smul.addr %s242, 48
        %s244 = scalar_lea.vmem [#allocation4], %s243
        // Predicated region
        $region41: #{_lambda_.1} parent=35 // pred_check
          %p245 = pneg %p69
        $region42: #{_lambda_.1} parent=35 // pred_check_branch
          %247 = sbr.rel (%p245) target = $region44
        $region43: #{_lambda_.1} parent=35 // pred_region
          %248 = dma.done %s241, 768
        $region44: #{_lambda_.1} parent=35 // pred_fallthru
          _
        // Predicated region
        $region45: #{_lambda_.1} parent=35 // pred_check
          %p249 = pneg %p90
        $region46: #{_lambda_.1} parent=35 // pred_check_branch
          %251 = sbr.rel (%p249) target = $region48
        $region47: #{_lambda_.1} parent=35 // pred_region
          %252 = dma.done [#allocation5], 256
        $region48: #{_lambda_.1} parent=35 // pred_fallthru
          _
        // Predicated region
        $region49: #{_lambda_.1} parent=35 // pred_check
          %p253 = pneg %p111
        $region50: #{_lambda_.1} parent=35 // pred_check_branch
          %255 = sbr.rel (%p253) target = $region52
        $region51: #{_lambda_.1} parent=35 // pred_region
          %256 = dma.done [#allocation8], 256
        $region52: #{_lambda_.1} parent=35 // pred_fallthru
          _
        %s257 = sand.u32 %s30, 1
        %s258 = scalar_lea.sflag [#allocation3], %s257
        %s259 = sand.u32 %s30, 1
        %s260 = smul.addr %s259, 48
        %s261 = scalar_lea.vmem [#allocation2], %s260
        %p262 = pneg %p43
        %p263 = pneg %p40
        %s264 = sand.u32 %s22, 1
        %s265 = scalar_lea.sflag [#allocation5], %s264
        %s266 = sand.u32 %s56, 1
        %s267 = smul.addr %s266, 48
        %s268 = scalar_lea.vmem [#allocation4], %s267
        %p269 = pneg %p69
        %p270 = pneg %p66
        %p271 = pneg %p90
        %p272 = pneg %p87
        %p273 = pneg %p111
        %p274 = pneg %p108
        %p275 = pneg %p137
        %p276 = pneg %p134
        %p277 = scmp.lt.s32.totalorder %s22, 1
        %s278 = scalar_select %p277, %s22, 1
        %s279 = smul.addr %s278, 4
        %s280 = scalar_lea.vmem %s4, %s279
        %p281 = scmp.lt.s32.totalorder %s22, 1
        %s282 = scalar_select %p281, %s22, 1
        %s283 = smul.addr %s282, 4
        %s284 = scalar_lea.vmem %s4, %s283
        %v285 = vld [vmem:[%s235] sm:$0xff]
        %v286 = vld [vmem:[%s235 + $0x8] sm:$0xff]
        %v287 = vld [vmem:[%s235 + $0x10] sm:$0xff]
        %v288 = vld [vmem:[%s235 + $0x18] sm:$0xff]
        %v289 = vld [vmem:[%s235 + $0x20] sm:$0xff]
        %v290 = vld [vmem:[%s235 + $0x28] sm:$0xff]
        %v291 = vld [vmem:[%s244] sm:$0xff]
        %v292 = vld [vmem:[%s244 + $0x8] sm:$0xff]
        %v293 = vld [vmem:[%s244 + $0x10] sm:$0xff]
        %v294 = vld [vmem:[%s244 + $0x18] sm:$0xff]
        %v295 = vld [vmem:[%s244 + $0x20] sm:$0xff]
        %v296 = vld [vmem:[%s244 + $0x28] sm:$0xff]
        %v297 = vld [vmem:[#allocation6] sm:$0xff]
        %v298 = vld [vmem:[#allocation6 + $0x8] sm:$0xff]
        %v299 = vld [vmem:[#allocation7] sm:$0xff]
        %v300 = vld [vmem:[#allocation7 + $0x8] sm:$0xff]
        %vm301 = vcmask 130048
        %v303 = vsel %vm301, %v285, 0
        %v306 = vsel %vm301, %v286, 0
        %v309 = vsel %vm301, %v287, 0
        %v312 = vsel %vm301, %v288, 0
        %v315 = vsel %vm301, %v289, 0
        %v318 = vsel %vm301, %v290, 0
        %320 = vmatprep.subr.mxu0 0.0
        %321 = vmatpush1.msra.mxu0 %v299
        %322 = vmatprep.subr.mxu0 0.0
        %323 = vmatpush1.msra.mxu0 %v300
        %324 = vmatprep.subr.mxu0 0.0
        %325 = vmatpush1.msra.mxu0 0.0
        %326 = vmatprep.subr.mxu0 0.0
        %327 = vmatpush1.msra.mxu0 0.0
        %328 = vmatprep.subr.mxu0 0.0
        %329 = vmatpush1.msra.mxu0 0.0
        %330 = vmatprep.subr.mxu0 0.0
        %331 = vmatpush1.msra.mxu0 0.0
        %332 = vmatprep.subr.mxu0 0.0
        %333 = vmatpush1.msra.mxu0 0.0
        %334 = vmatprep.subr.mxu0 0.0
        %335 = vmatpush1.msra.mxu0 0.0
        %336 = vmatprep.subr.mxu0 0.0
        %337 = vmatpush1.msra.mxu0 0.0
        %338 = vmatprep.subr.mxu0 0.0
        %339 = vmatpush1.msra.mxu0 0.0
        %340 = vmatprep.subr.mxu0 0.0
        %341 = vmatpush1.msra.mxu0 0.0
        %342 = vmatprep.subr.mxu0 0.0
        %343 = vmatpush1.msra.mxu0 0.0
        %344 = vmatprep.subr.mxu0 0.0
        %345 = vmatpush1.msra.mxu0 0.0
        %346 = vmatprep.subr.mxu0 0.0
        %347 = vmatpush1.msra.mxu0 0.0
        %348 = vmatprep.subr.mxu0 0.0
        %349 = vmatpush1.msra.mxu0 0.0
        %350 = vmatprep.subr.mxu0 0.0
        %351 = vmatpush1.msra.mxu0 0.0
        %352 = vmatprep.subr.mxu0 0.0
        %353 = vmatpush1.msra.mxu0 0.0
        %354 = vmatprep.subr.mxu0 0.0
        %355 = vmatpush1.msra.mxu0 0.0
        %356 = vmatprep.subr.mxu0 0.0
        %357 = vmatpush1.msra.mxu0 0.0
        %358 = vmatprep.subr.mxu0 0.0
        %359 = vmatpush1.msra.mxu0 0.0
        %360 = vmatprep.subr.mxu0 0.0
        %361 = vmatpush1.msra.mxu0 0.0
        %362 = vmatprep.subr.mxu0 0.0
        %363 = vmatpush1.msra.mxu0 0.0
        %364 = vmatprep.subr.mxu0 0.0
        %365 = vmatpush1.msra.mxu0 0.0
        %366 = vmatprep.subr.mxu0 0.0
        %367 = vmatpush1.msra.mxu0 0.0
        %368 = vmatprep.subr.mxu0 0.0
        %369 = vmatpush1.msra.mxu0 0.0
        %370 = vmatprep.subr.mxu0 0.0
        %371 = vmatpush1.msra.mxu0 0.0
        %372 = vmatprep.subr.mxu0 0.0
        %373 = vmatpush1.msra.mxu0 0.0
        %374 = vmatprep.subr.mxu0 0.0
        %375 = vmatpush1.msra.mxu0 0.0
        %376 = vmatprep.subr.mxu0 0.0
        %377 = vmatpush1.msra.mxu0 0.0
        %378 = vmatprep.subr.mxu0 0.0
        %379 = vmatpush1.msra.mxu0 0.0
        %380 = vmatprep.subr.mxu0 0.0
        %381 = vmatpush1.msra.mxu0 0.0
        %382 = vmatprep.subr.mxu0 0.0
        %383 = vmatpush1.msra.mxu0 0.0
        %384 = vmatprep.mubr.f32.mxu0 0.0
        %385 = vmatmul.mubr.f32.gmra.mrb[0].mxu0 %v303
        %v386 = vpop.f32.mrb[0].mxu0
        %v387 = vadd.f32 0.0, %v386
        %v388 = vpop.f32.mrb[0].mxu0
        %389 = vmatprep.mubr.f32.mxu0 0.0
        %390 = vmatmul.mubr.f32.gmra.mrb[0].mxu0 %v306
        %v391 = vpop.f32.mrb[0].mxu0
        %v392 = vadd.f32 0.0, %v391
        %v393 = vpop.f32.mrb[0].mxu0
        %394 = vmatprep.mubr.f32.mxu0 0.0
        %395 = vmatmul.mubr.f32.gmra.mrb[0].mxu0 %v309
        %v396 = vpop.f32.mrb[0].mxu0
        %v397 = vadd.f32 0.0, %v396
        %v398 = vpop.f32.mrb[0].mxu0
        %399 = vmatprep.mubr.f32.mxu0 0.0
        %400 = vmatmul.mubr.f32.gmra.mrb[0].mxu0 %v312
        %v401 = vpop.f32.mrb[0].mxu0
        %v402 = vadd.f32 0.0, %v401
        %v403 = vpop.f32.mrb[0].mxu0
        %404 = vmatprep.mubr.f32.mxu0 0.0
        %405 = vmatmul.mubr.f32.gmra.mrb[0].mxu0 %v315
        %v406 = vpop.f32.mrb[0].mxu0
        %v407 = vadd.f32 0.0, %v406
        %v408 = vpop.f32.mrb[0].mxu0
        %409 = vmatprep.mubr.f32.mxu0 0.0
        %410 = vmatmul.mubr.f32.gmra.mrb[0].mxu0 %v318
        %v411 = vpop.f32.mrb[0].mxu0
        %v412 = vadd.f32 0.0, %v411
        %v413 = vpop.f32.mrb[0].mxu0
        %414 = vdwg.mxu0
        %v416 = vsel %vm301, %v297, 0
        %v419 = vsel %vm301, %v298, 0
        %421 = vmatprep.subr.mxu0 0.0
        %422 = vmatpush1.msra.mxu0 %v387
        %423 = vmatprep.subr.mxu0 0.0
        %424 = vmatpush1.msra.mxu0 %v392
        %425 = vmatprep.subr.mxu0 0.0
        %426 = vmatpush1.msra.mxu0 0.0
        %427 = vmatprep.subr.mxu0 0.0
        %428 = vmatpush1.msra.mxu0 0.0
        %429 = vmatprep.subr.mxu0 0.0
        %430 = vmatpush1.msra.mxu0 0.0
        %431 = vmatprep.subr.mxu0 0.0
        %432 = vmatpush1.msra.mxu0 0.0
        %433 = vmatprep.subr.mxu0 0.0
        %434 = vmatpush1.msra.mxu0 0.0
        %435 = vmatprep.subr.mxu0 0.0
        %436 = vmatpush1.msra.mxu0 0.0
        %437 = vmatprep.subr.mxu0 0.0
        %438 = vmatpush1.msra.mxu0 0.0
        %439 = vmatprep.subr.mxu0 0.0
        %440 = vmatpush1.msra.mxu0 0.0
        %441 = vmatprep.subr.mxu0 0.0
        %442 = vmatpush1.msra.mxu0 0.0
        %443 = vmatprep.subr.mxu0 0.0
        %444 = vmatpush1.msra.mxu0 0.0
        %445 = vmatprep.subr.mxu0 0.0
        %446 = vmatpush1.msra.mxu0 0.0
        %447 = vmatprep.subr.mxu0 0.0
        %448 = vmatpush1.msra.mxu0 0.0
        %449 = vmatprep.subr.mxu0 0.0
        %450 = vmatpush1.msra.mxu0 0.0
        %451 = vmatprep.subr.mxu0 0.0
        %452 = vmatpush1.msra.mxu0 0.0
        %453 = vmatprep.subr.mxu0 0.0
        %454 = vmatpush1.msra.mxu0 0.0
        %455 = vmatprep.subr.mxu0 0.0
        %456 = vmatpush1.msra.mxu0 0.0
        %457 = vmatprep.subr.mxu0 0.0
        %458 = vmatpush1.msra.mxu0 0.0
        %459 = vmatprep.subr.mxu0 0.0
        %460 = vmatpush1.msra.mxu0 0.0
        %461 = vmatprep.subr.mxu0 0.0
        %462 = vmatpush1.msra.mxu0 0.0
        %463 = vmatprep.subr.mxu0 0.0
        %464 = vmatpush1.msra.mxu0 0.0
        %465 = vmatprep.subr.mxu0 0.0
        %466 = vmatpush1.msra.mxu0 0.0
        %467 = vmatprep.subr.mxu0 0.0
        %468 = vmatpush1.msra.mxu0 0.0
        %469 = vmatprep.subr.mxu0 0.0
        %470 = vmatpush1.msra.mxu0 0.0
        %471 = vmatprep.subr.mxu0 0.0
        %472 = vmatpush1.msra.mxu0 0.0
        %473 = vmatprep.subr.mxu0 0.0
        %474 = vmatpush1.msra.mxu0 0.0
        %475 = vmatprep.subr.mxu0 0.0
        %476 = vmatpush1.msra.mxu0 0.0
        %477 = vmatprep.subr.mxu0 0.0
        %478 = vmatpush1.msra.mxu0 0.0
        %479 = vmatprep.subr.mxu0 0.0
        %480 = vmatpush1.msra.mxu0 0.0
        %481 = vmatprep.subr.mxu0 0.0
        %482 = vmatpush1.msra.mxu0 0.0
        %483 = vmatprep.subr.mxu0 0.0
        %484 = vmatpush1.msra.mxu0 0.0
        %485 = vmatprep.mubr.f32.mxu0 0.0
        %486 = vmatmul.mubr.f32.gmra.mrb[0].mxu0 %v416
        %v487 = vpop.f32.mrb[0].mxu0
        %v488 = vadd.f32 0.0, %v487
        %v489 = vpop.f32.mrb[0].mxu0
        %490 = vmatprep.mubr.f32.mxu0 0.0
        %491 = vmatmul.mubr.f32.gmra.mrb[0].mxu0 %v419
        %v492 = vpop.f32.mrb[0].mxu0
        %v493 = vadd.f32 0.0, %v492
        %v494 = vpop.f32.mrb[0].mxu0
        %495 = vdwg.mxu0
        %496 = vmatprep.subr.mxu0 0.0
        %497 = vmatpush1.msra.mxu0 %v397
        %498 = vmatprep.subr.mxu0 0.0
        %499 = vmatpush1.msra.mxu0 %v402
        %500 = vmatprep.subr.mxu0 0.0
        %501 = vmatpush1.msra.mxu0 0.0
        %502 = vmatprep.subr.mxu0 0.0
        %503 = vmatpush1.msra.mxu0 0.0
        %504 = vmatprep.subr.mxu0 0.0
        %505 = vmatpush1.msra.mxu0 0.0
        %506 = vmatprep.subr.mxu0 0.0
        %507 = vmatpush1.msra.mxu0 0.0
        %508 = vmatprep.subr.mxu0 0.0
        %509 = vmatpush1.msra.mxu0 0.0
        %510 = vmatprep.subr.mxu0 0.0
        %511 = vmatpush1.msra.mxu0 0.0
        %512 = vmatprep.subr.mxu0 0.0
        %513 = vmatpush1.msra.mxu0 0.0
        %514 = vmatprep.subr.mxu0 0.0
        %515 = vmatpush1.msra.mxu0 0.0
        %516 = vmatprep.subr.mxu0 0.0
        %517 = vmatpush1.msra.mxu0 0.0
        %518 = vmatprep.subr.mxu0 0.0
        %519 = vmatpush1.msra.mxu0 0.0
        %520 = vmatprep.subr.mxu0 0.0
        %521 = vmatpush1.msra.mxu0 0.0
        %522 = vmatprep.subr.mxu0 0.0
        %523 = vmatpush1.msra.mxu0 0.0
        %524 = vmatprep.subr.mxu0 0.0
        %525 = vmatpush1.msra.mxu0 0.0
        %526 = vmatprep.subr.mxu0 0.0
        %527 = vmatpush1.msra.mxu0 0.0
        %528 = vmatprep.subr.mxu0 0.0
        %529 = vmatpush1.msra.mxu0 0.0
        %530 = vmatprep.subr.mxu0 0.0
        %531 = vmatpush1.msra.mxu0 0.0
        %532 = vmatprep.subr.mxu0 0.0
        %533 = vmatpush1.msra.mxu0 0.0
        %534 = vmatprep.subr.mxu0 0.0
        %535 = vmatpush1.msra.mxu0 0.0
        %536 = vmatprep.subr.mxu0 0.0
        %537 = vmatpush1.msra.mxu0 0.0
        %538 = vmatprep.subr.mxu0 0.0
        %539 = vmatpush1.msra.mxu0 0.0
        %540 = vmatprep.subr.mxu0 0.0
        %541 = vmatpush1.msra.mxu0 0.0
        %542 = vmatprep.subr.mxu0 0.0
        %543 = vmatpush1.msra.mxu0 0.0
        %544 = vmatprep.subr.mxu0 0.0
        %545 = vmatpush1.msra.mxu0 0.0
        %546 = vmatprep.subr.mxu0 0.0
        %547 = vmatpush1.msra.mxu0 0.0
        %548 = vmatprep.subr.mxu0 0.0
        %549 = vmatpush1.msra.mxu0 0.0
        %550 = vmatprep.subr.mxu0 0.0
        %551 = vmatpush1.msra.mxu0 0.0
        %552 = vmatprep.subr.mxu0 0.0
        %553 = vmatpush1.msra.mxu0 0.0
        %554 = vmatprep.subr.mxu0 0.0
        %555 = vmatpush1.msra.mxu0 0.0
        %556 = vmatprep.subr.mxu0 0.0
        %557 = vmatpush1.msra.mxu0 0.0
        %558 = vmatprep.subr.mxu0 0.0
        %559 = vmatpush1.msra.mxu0 0.0
        %560 = vmatprep.mubr.f32.mxu0 0.0
        %561 = vmatmul.mubr.f32.gmra.mrb[0].mxu0 %v416
        %v562 = vpop.f32.mrb[0].mxu0
        %v563 = vadd.f32 0.0, %v562
        %v564 = vpop.f32.mrb[0].mxu0
        %565 = vmatprep.mubr.f32.mxu0 0.0
        %566 = vmatmul.mubr.f32.gmra.mrb[0].mxu0 %v419
        %v567 = vpop.f32.mrb[0].mxu0
        %v568 = vadd.f32 0.0, %v567
        %v569 = vpop.f32.mrb[0].mxu0
        %570 = vdwg.mxu0
        %571 = vmatprep.subr.mxu0 0.0
        %572 = vmatpush1.msra.mxu0 %v407
        %573 = vmatprep.subr.mxu0 0.0
        %574 = vmatpush1.msra.mxu0 %v412
        %575 = vmatprep.subr.mxu0 0.0
        %576 = vmatpush1.msra.mxu0 0.0
        %577 = vmatprep.subr.mxu0 0.0
        %578 = vmatpush1.msra.mxu0 0.0
        %579 = vmatprep.subr.mxu0 0.0
        %580 = vmatpush1.msra.mxu0 0.0
        %581 = vmatprep.subr.mxu0 0.0
        %582 = vmatpush1.msra.mxu0 0.0
        %583 = vmatprep.subr.mxu0 0.0
        %584 = vmatpush1.msra.mxu0 0.0
        %585 = vmatprep.subr.mxu0 0.0
        %586 = vmatpush1.msra.mxu0 0.0
        %587 = vmatprep.subr.mxu0 0.0
        %588 = vmatpush1.msra.mxu0 0.0
        %589 = vmatprep.subr.mxu0 0.0
        %590 = vmatpush1.msra.mxu0 0.0
        %591 = vmatprep.subr.mxu0 0.0
        %592 = vmatpush1.msra.mxu0 0.0
        %593 = vmatprep.subr.mxu0 0.0
        %594 = vmatpush1.msra.mxu0 0.0
        %595 = vmatprep.subr.mxu0 0.0
        %596 = vmatpush1.msra.mxu0 0.0
        %597 = vmatprep.subr.mxu0 0.0
        %598 = vmatpush1.msra.mxu0 0.0
        %599 = vmatprep.subr.mxu0 0.0
        %600 = vmatpush1.msra.mxu0 0.0
        %601 = vmatprep.subr.mxu0 0.0
        %602 = vmatpush1.msra.mxu0 0.0
        %603 = vmatprep.subr.mxu0 0.0
        %604 = vmatpush1.msra.mxu0 0.0
        %605 = vmatprep.subr.mxu0 0.0
        %606 = vmatpush1.msra.mxu0 0.0
        %607 = vmatprep.subr.mxu0 0.0
        %608 = vmatpush1.msra.mxu0 0.0
        %609 = vmatprep.subr.mxu0 0.0
        %610 = vmatpush1.msra.mxu0 0.0
        %611 = vmatprep.subr.mxu0 0.0
        %612 = vmatpush1.msra.mxu0 0.0
        %613 = vmatprep.subr.mxu0 0.0
        %614 = vmatpush1.msra.mxu0 0.0
        %615 = vmatprep.subr.mxu0 0.0
        %616 = vmatpush1.msra.mxu0 0.0
        %617 = vmatprep.subr.mxu0 0.0
        %618 = vmatpush1.msra.mxu0 0.0
        %619 = vmatprep.subr.mxu0 0.0
        %620 = vmatpush1.msra.mxu0 0.0
        %621 = vmatprep.subr.mxu0 0.0
        %622 = vmatpush1.msra.mxu0 0.0
        %623 = vmatprep.subr.mxu0 0.0
        %624 = vmatpush1.msra.mxu0 0.0
        %625 = vmatprep.subr.mxu0 0.0
        %626 = vmatpush1.msra.mxu0 0.0
        %627 = vmatprep.subr.mxu0 0.0
        %628 = vmatpush1.msra.mxu0 0.0
        %629 = vmatprep.subr.mxu0 0.0
        %630 = vmatpush1.msra.mxu0 0.0
        %631 = vmatprep.subr.mxu0 0.0
        %632 = vmatpush1.msra.mxu0 0.0
        %633 = vmatprep.subr.mxu0 0.0
        %634 = vmatpush1.msra.mxu0 0.0
        %635 = vmatprep.mubr.f32.mxu0 0.0
        %636 = vmatmul.mubr.f32.gmra.mrb[0].mxu0 %v416
        %v637 = vpop.f32.mrb[0].mxu0
        %v638 = vadd.f32 0.0, %v637
        %v639 = vpop.f32.mrb[0].mxu0
        %640 = vmatprep.mubr.f32.mxu0 0.0
        %641 = vmatmul.mubr.f32.gmra.mrb[0].mxu0 %v419
        %v642 = vpop.f32.mrb[0].mxu0
        %v643 = vadd.f32 0.0, %v642
        %v644 = vpop.f32.mrb[0].mxu0
        %645 = vdwg.mxu0
        %v647 = vsel %vm301, %v291, 0
        %v650 = vsel %vm301, %v292, 0
        %v653 = vsel %vm301, %v293, 0
        %v656 = vsel %vm301, %v294, 0
        %v659 = vsel %vm301, %v295, 0
        %v662 = vsel %vm301, %v296, 0
        %664 = vmatprep.subr.mxu0 0.0
        %665 = vmatpush1.msra.mxu0 %v299
        %666 = vmatprep.subr.mxu0 0.0
        %667 = vmatpush1.msra.mxu0 %v300
        %668 = vmatprep.subr.mxu0 0.0
        %669 = vmatpush1.msra.mxu0 0.0
        %670 = vmatprep.subr.mxu0 0.0
        %671 = vmatpush1.msra.mxu0 0.0
        %672 = vmatprep.subr.mxu0 0.0
        %673 = vmatpush1.msra.mxu0 0.0
        %674 = vmatprep.subr.mxu0 0.0
        %675 = vmatpush1.msra.mxu0 0.0
        %676 = vmatprep.subr.mxu0 0.0
        %677 = vmatpush1.msra.mxu0 0.0
        %678 = vmatprep.subr.mxu0 0.0
        %679 = vmatpush1.msra.mxu0 0.0
        %680 = vmatprep.subr.mxu0 0.0
        %681 = vmatpush1.msra.mxu0 0.0
        %682 = vmatprep.subr.mxu0 0.0
        %683 = vmatpush1.msra.mxu0 0.0
        %684 = vmatprep.subr.mxu0 0.0
        %685 = vmatpush1.msra.mxu0 0.0
        %686 = vmatprep.subr.mxu0 0.0
        %687 = vmatpush1.msra.mxu0 0.0
        %688 = vmatprep.subr.mxu0 0.0
        %689 = vmatpush1.msra.mxu0 0.0
        %690 = vmatprep.subr.mxu0 0.0
        %691 = vmatpush1.msra.mxu0 0.0
        %692 = vmatprep.subr.mxu0 0.0
        %693 = vmatpush1.msra.mxu0 0.0
        %694 = vmatprep.subr.mxu0 0.0
        %695 = vmatpush1.msra.mxu0 0.0
        %696 = vmatprep.subr.mxu0 0.0
        %697 = vmatpush1.msra.mxu0 0.0
        %698 = vmatprep.subr.mxu0 0.0
        %699 = vmatpush1.msra.mxu0 0.0
        %700 = vmatprep.subr.mxu0 0.0
        %701 = vmatpush1.msra.mxu0 0.0
        %702 = vmatprep.subr.mxu0 0.0
        %703 = vmatpush1.msra.mxu0 0.0
        %704 = vmatprep.subr.mxu0 0.0
        %705 = vmatpush1.msra.mxu0 0.0
        %706 = vmatprep.subr.mxu0 0.0
        %707 = vmatpush1.msra.mxu0 0.0
        %708 = vmatprep.subr.mxu0 0.0
        %709 = vmatpush1.msra.mxu0 0.0
        %710 = vmatprep.subr.mxu0 0.0
        %711 = vmatpush1.msra.mxu0 0.0
        %712 = vmatprep.subr.mxu0 0.0
        %713 = vmatpush1.msra.mxu0 0.0
        %714 = vmatprep.subr.mxu0 0.0
        %715 = vmatpush1.msra.mxu0 0.0
        %716 = vmatprep.subr.mxu0 0.0
        %717 = vmatpush1.msra.mxu0 0.0
        %718 = vmatprep.subr.mxu0 0.0
        %719 = vmatpush1.msra.mxu0 0.0
        %720 = vmatprep.subr.mxu0 0.0
        %721 = vmatpush1.msra.mxu0 0.0
        %722 = vmatprep.subr.mxu0 0.0
        %723 = vmatpush1.msra.mxu0 0.0
        %724 = vmatprep.subr.mxu0 0.0
        %725 = vmatpush1.msra.mxu0 0.0
        %726 = vmatprep.subr.mxu0 0.0
        %727 = vmatpush1.msra.mxu0 0.0
        %728 = vmatprep.mubr.f32.mxu0 0.0
        %729 = vmatmul.mubr.f32.gmra.mrb[0].mxu0 %v647
        %v730 = vpop.f32.mrb[0].mxu0
        %v731 = vadd.f32 0.0, %v730
        %v732 = vpop.f32.mrb[0].mxu0
        %733 = vmatprep.mubr.f32.mxu0 0.0
        %734 = vmatmul.mubr.f32.gmra.mrb[0].mxu0 %v650
        %v735 = vpop.f32.mrb[0].mxu0
        %v736 = vadd.f32 0.0, %v735
        %v737 = vpop.f32.mrb[0].mxu0
        %738 = vmatprep.mubr.f32.mxu0 0.0
        %739 = vmatmul.mubr.f32.gmra.mrb[0].mxu0 %v653
        %v740 = vpop.f32.mrb[0].mxu0
        %v741 = vadd.f32 0.0, %v740
        %v742 = vpop.f32.mrb[0].mxu0
        %743 = vmatprep.mubr.f32.mxu0 0.0
        %744 = vmatmul.mubr.f32.gmra.mrb[0].mxu0 %v656
        %v745 = vpop.f32.mrb[0].mxu0
        %v746 = vadd.f32 0.0, %v745
        %v747 = vpop.f32.mrb[0].mxu0
        %748 = vmatprep.mubr.f32.mxu0 0.0
        %749 = vmatmul.mubr.f32.gmra.mrb[0].mxu0 %v659
        %v750 = vpop.f32.mrb[0].mxu0
        %v751 = vadd.f32 0.0, %v750
        %v752 = vpop.f32.mrb[0].mxu0
        %753 = vmatprep.mubr.f32.mxu0 0.0
        %754 = vmatmul.mubr.f32.gmra.mrb[0].mxu0 %v662
        %v755 = vpop.f32.mrb[0].mxu0
        %v756 = vadd.f32 0.0, %v755
        %v757 = vpop.f32.mrb[0].mxu0
        %758 = vdwg.mxu0
        %759 = vmatprep.subr.mxu0 0.0
        %760 = vmatpush1.msra.mxu0 %v731
        %761 = vmatprep.subr.mxu0 0.0
        %762 = vmatpush1.msra.mxu0 %v736
        %763 = vmatprep.subr.mxu0 0.0
        %764 = vmatpush1.msra.mxu0 0.0
        %765 = vmatprep.subr.mxu0 0.0
        %766 = vmatpush1.msra.mxu0 0.0
        %767 = vmatprep.subr.mxu0 0.0
        %768 = vmatpush1.msra.mxu0 0.0
        %769 = vmatprep.subr.mxu0 0.0
        %770 = vmatpush1.msra.mxu0 0.0
        %771 = vmatprep.subr.mxu0 0.0
        %772 = vmatpush1.msra.mxu0 0.0
        %773 = vmatprep.subr.mxu0 0.0
        %774 = vmatpush1.msra.mxu0 0.0
        %775 = vmatprep.subr.mxu0 0.0
        %776 = vmatpush1.msra.mxu0 0.0
        %777 = vmatprep.subr.mxu0 0.0
        %778 = vmatpush1.msra.mxu0 0.0
        %779 = vmatprep.subr.mxu0 0.0
        %780 = vmatpush1.msra.mxu0 0.0
        %781 = vmatprep.subr.mxu0 0.0
        %782 = vmatpush1.msra.mxu0 0.0
        %783 = vmatprep.subr.mxu0 0.0
        %784 = vmatpush1.msra.mxu0 0.0
        %785 = vmatprep.subr.mxu0 0.0
        %786 = vmatpush1.msra.mxu0 0.0
        %787 = vmatprep.subr.mxu0 0.0
        %788 = vmatpush1.msra.mxu0 0.0
        %789 = vmatprep.subr.mxu0 0.0
        %790 = vmatpush1.msra.mxu0 0.0
        %791 = vmatprep.subr.mxu0 0.0
        %792 = vmatpush1.msra.mxu0 0.0
        %793 = vmatprep.subr.mxu0 0.0
        %794 = vmatpush1.msra.mxu0 0.0
        %795 = vmatprep.subr.mxu0 0.0
        %796 = vmatpush1.msra.mxu0 0.0
        %797 = vmatprep.subr.mxu0 0.0
        %798 = vmatpush1.msra.mxu0 0.0
        %799 = vmatprep.subr.mxu0 0.0
        %800 = vmatpush1.msra.mxu0 0.0
        %801 = vmatprep.subr.mxu0 0.0
        %802 = vmatpush1.msra.mxu0 0.0
        %803 = vmatprep.subr.mxu0 0.0
        %804 = vmatpush1.msra.mxu0 0.0
        %805 = vmatprep.subr.mxu0 0.0
        %806 = vmatpush1.msra.mxu0 0.0
        %807 = vmatprep.subr.mxu0 0.0
        %808 = vmatpush1.msra.mxu0 0.0
        %809 = vmatprep.subr.mxu0 0.0
        %810 = vmatpush1.msra.mxu0 0.0
        %811 = vmatprep.subr.mxu0 0.0
        %812 = vmatpush1.msra.mxu0 0.0
        %813 = vmatprep.subr.mxu0 0.0
        %814 = vmatpush1.msra.mxu0 0.0
        %815 = vmatprep.subr.mxu0 0.0
        %816 = vmatpush1.msra.mxu0 0.0
        %817 = vmatprep.subr.mxu0 0.0
        %818 = vmatpush1.msra.mxu0 0.0
        %819 = vmatprep.subr.mxu0 0.0
        %820 = vmatpush1.msra.mxu0 0.0
        %821 = vmatprep.subr.mxu0 0.0
        %822 = vmatpush1.msra.mxu0 0.0
        %823 = vmatprep.mubr.f32.mxu0 0.0
        %824 = vmatmul.mubr.f32.gmra.mrb[0].mxu0 %v416
        %v825 = vpop.f32.mrb[0].mxu0
        %v826 = vadd.f32 0.0, %v825
        %v827 = vpop.f32.mrb[0].mxu0
        %828 = vmatprep.mubr.f32.mxu0 0.0
        %829 = vmatmul.mubr.f32.gmra.mrb[0].mxu0 %v419
        %v830 = vpop.f32.mrb[0].mxu0
        %v831 = vadd.f32 0.0, %v830
        %v832 = vpop.f32.mrb[0].mxu0
        %833 = vdwg.mxu0
        %834 = vmatprep.subr.mxu0 0.0
        %835 = vmatpush1.msra.mxu0 %v741
        %836 = vmatprep.subr.mxu0 0.0
        %837 = vmatpush1.msra.mxu0 %v746
        %838 = vmatprep.subr.mxu0 0.0
        %839 = vmatpush1.msra.mxu0 0.0
        %840 = vmatprep.subr.mxu0 0.0
        %841 = vmatpush1.msra.mxu0 0.0
        %842 = vmatprep.subr.mxu0 0.0
        %843 = vmatpush1.msra.mxu0 0.0
        %844 = vmatprep.subr.mxu0 0.0
        %845 = vmatpush1.msra.mxu0 0.0
        %846 = vmatprep.subr.mxu0 0.0
        %847 = vmatpush1.msra.mxu0 0.0
        %848 = vmatprep.subr.mxu0 0.0
        %849 = vmatpush1.msra.mxu0 0.0
        %850 = vmatprep.subr.mxu0 0.0
        %851 = vmatpush1.msra.mxu0 0.0
        %852 = vmatprep.subr.mxu0 0.0
        %853 = vmatpush1.msra.mxu0 0.0
        %854 = vmatprep.subr.mxu0 0.0
        %855 = vmatpush1.msra.mxu0 0.0
        %856 = vmatprep.subr.mxu0 0.0
        %857 = vmatpush1.msra.mxu0 0.0
        %858 = vmatprep.subr.mxu0 0.0
        %859 = vmatpush1.msra.mxu0 0.0
        %860 = vmatprep.subr.mxu0 0.0
        %861 = vmatpush1.msra.mxu0 0.0
        %862 = vmatprep.subr.mxu0 0.0
        %863 = vmatpush1.msra.mxu0 0.0
        %864 = vmatprep.subr.mxu0 0.0
        %865 = vmatpush1.msra.mxu0 0.0
        %866 = vmatprep.subr.mxu0 0.0
        %867 = vmatpush1.msra.mxu0 0.0
        %868 = vmatprep.subr.mxu0 0.0
        %869 = vmatpush1.msra.mxu0 0.0
        %870 = vmatprep.subr.mxu0 0.0
        %871 = vmatpush1.msra.mxu0 0.0
        %872 = vmatprep.subr.mxu0 0.0
        %873 = vmatpush1.msra.mxu0 0.0
        %874 = vmatprep.subr.mxu0 0.0
        %875 = vmatpush1.msra.mxu0 0.0
        %876 = vmatprep.subr.mxu0 0.0
        %877 = vmatpush1.msra.mxu0 0.0
        %878 = vmatprep.subr.mxu0 0.0
        %879 = vmatpush1.msra.mxu0 0.0
        %880 = vmatprep.subr.mxu0 0.0
        %881 = vmatpush1.msra.mxu0 0.0
        %882 = vmatprep.subr.mxu0 0.0
        %883 = vmatpush1.msra.mxu0 0.0
        %884 = vmatprep.subr.mxu0 0.0
        %885 = vmatpush1.msra.mxu0 0.0
        %886 = vmatprep.subr.mxu0 0.0
        %887 = vmatpush1.msra.mxu0 0.0
        %888 = vmatprep.subr.mxu0 0.0
        %889 = vmatpush1.msra.mxu0 0.0
        %890 = vmatprep.subr.mxu0 0.0
        %891 = vmatpush1.msra.mxu0 0.0
        %892 = vmatprep.subr.mxu0 0.0
        %893 = vmatpush1.msra.mxu0 0.0
        %894 = vmatprep.subr.mxu0 0.0
        %895 = vmatpush1.msra.mxu0 0.0
        %896 = vmatprep.subr.mxu0 0.0
        %897 = vmatpush1.msra.mxu0 0.0
        %898 = vmatprep.mubr.f32.mxu0 0.0
        %899 = vmatmul.mubr.f32.gmra.mrb[0].mxu0 %v416
        %v900 = vpop.f32.mrb[0].mxu0
        %v901 = vadd.f32 0.0, %v900
        %v902 = vpop.f32.mrb[0].mxu0
        %903 = vmatprep.mubr.f32.mxu0 0.0
        %904 = vmatmul.mubr.f32.gmra.mrb[0].mxu0 %v419
        %v905 = vpop.f32.mrb[0].mxu0
        %v906 = vadd.f32 0.0, %v905
        %v907 = vpop.f32.mrb[0].mxu0
        %908 = vdwg.mxu0
        %909 = vmatprep.subr.mxu0 0.0
        %910 = vmatpush1.msra.mxu0 %v751
        %911 = vmatprep.subr.mxu0 0.0
        %912 = vmatpush1.msra.mxu0 %v756
        %913 = vmatprep.subr.mxu0 0.0
        %914 = vmatpush1.msra.mxu0 0.0
        %915 = vmatprep.subr.mxu0 0.0
        %916 = vmatpush1.msra.mxu0 0.0
        %917 = vmatprep.subr.mxu0 0.0
        %918 = vmatpush1.msra.mxu0 0.0
        %919 = vmatprep.subr.mxu0 0.0
        %920 = vmatpush1.msra.mxu0 0.0
        %921 = vmatprep.subr.mxu0 0.0
        %922 = vmatpush1.msra.mxu0 0.0
        %923 = vmatprep.subr.mxu0 0.0
        %924 = vmatpush1.msra.mxu0 0.0
        %925 = vmatprep.subr.mxu0 0.0
        %926 = vmatpush1.msra.mxu0 0.0
        %927 = vmatprep.subr.mxu0 0.0
        %928 = vmatpush1.msra.mxu0 0.0
        %929 = vmatprep.subr.mxu0 0.0
        %930 = vmatpush1.msra.mxu0 0.0
        %931 = vmatprep.subr.mxu0 0.0
        %932 = vmatpush1.msra.mxu0 0.0
        %933 = vmatprep.subr.mxu0 0.0
        %934 = vmatpush1.msra.mxu0 0.0
        %935 = vmatprep.subr.mxu0 0.0
        %936 = vmatpush1.msra.mxu0 0.0
        %937 = vmatprep.subr.mxu0 0.0
        %938 = vmatpush1.msra.mxu0 0.0
        %939 = vmatprep.subr.mxu0 0.0
        %940 = vmatpush1.msra.mxu0 0.0
        %941 = vmatprep.subr.mxu0 0.0
        %942 = vmatpush1.msra.mxu0 0.0
        %943 = vmatprep.subr.mxu0 0.0
        %944 = vmatpush1.msra.mxu0 0.0
        %945 = vmatprep.subr.mxu0 0.0
        %946 = vmatpush1.msra.mxu0 0.0
        %947 = vmatprep.subr.mxu0 0.0
        %948 = vmatpush1.msra.mxu0 0.0
        %949 = vmatprep.subr.mxu0 0.0
        %950 = vmatpush1.msra.mxu0 0.0
        %951 = vmatprep.subr.mxu0 0.0
        %952 = vmatpush1.msra.mxu0 0.0
        %953 = vmatprep.subr.mxu0 0.0
        %954 = vmatpush1.msra.mxu0 0.0
        %955 = vmatprep.subr.mxu0 0.0
        %956 = vmatpush1.msra.mxu0 0.0
        %957 = vmatprep.subr.mxu0 0.0
        %958 = vmatpush1.msra.mxu0 0.0
        %959 = vmatprep.subr.mxu0 0.0
        %960 = vmatpush1.msra.mxu0 0.0
        %961 = vmatprep.subr.mxu0 0.0
        %962 = vmatpush1.msra.mxu0 0.0
        %963 = vmatprep.subr.mxu0 0.0
        %964 = vmatpush1.msra.mxu0 0.0
        %965 = vmatprep.subr.mxu0 0.0
        %966 = vmatpush1.msra.mxu0 0.0
        %967 = vmatprep.subr.mxu0 0.0
        %968 = vmatpush1.msra.mxu0 0.0
        %969 = vmatprep.subr.mxu0 0.0
        %970 = vmatpush1.msra.mxu0 0.0
        %971 = vmatprep.subr.mxu0 0.0
        %972 = vmatpush1.msra.mxu0 0.0
        %973 = vmatprep.mubr.f32.mxu0 0.0
        %974 = vmatmul.mubr.f32.gmra.mrb[0].mxu0 %v416
        %v975 = vpop.f32.mrb[0].mxu0
        %v976 = vadd.f32 0.0, %v975
        %v977 = vpop.f32.mrb[0].mxu0
        %978 = vmatprep.mubr.f32.mxu0 0.0
        %979 = vmatmul.mubr.f32.gmra.mrb[0].mxu0 %v419
        %v980 = vpop.f32.mrb[0].mxu0
        %v981 = vadd.f32 0.0, %v980
        %v982 = vpop.f32.mrb[0].mxu0
        %983 = vdwg.mxu0
        %v984 = vmul.f32 %v285, %v285
        %v985 = vmul.f32 %v286, %v286
        %v986 = vmul.f32 %v287, %v287
        %v987 = vmul.f32 %v288, %v288
        %v988 = vmul.f32 %v289, %v289
        %v989 = vmul.f32 %v290, %v290
        %v991 = vsel %vm301, %v984, 0
        %v994 = vsel %vm301, %v985, 0
        %v997 = vsel %vm301, %v986, 0
        %v1000 = vsel %vm301, %v987, 0
        %v1003 = vsel %vm301, %v988, 0
        %v1006 = vsel %vm301, %v989, 0
        %1008 = vmatprep.subr.mxu0 0.0
        %1009 = vmatpush1.msra.mxu0 %v299
        %1010 = vmatprep.subr.mxu0 0.0
        %1011 = vmatpush1.msra.mxu0 %v300
        %1012 = vmatprep.subr.mxu0 0.0
        %1013 = vmatpush1.msra.mxu0 0.0
        %1014 = vmatprep.subr.mxu0 0.0
        %1015 = vmatpush1.msra.mxu0 0.0
        %1016 = vmatprep.subr.mxu0 0.0
        %1017 = vmatpush1.msra.mxu0 0.0
        %1018 = vmatprep.subr.mxu0 0.0
        %1019 = vmatpush1.msra.mxu0 0.0
        %1020 = vmatprep.subr.mxu0 0.0
        %1021 = vmatpush1.msra.mxu0 0.0
        %1022 = vmatprep.subr.mxu0 0.0
        %1023 = vmatpush1.msra.mxu0 0.0
        %1024 = vmatprep.subr.mxu0 0.0
        %1025 = vmatpush1.msra.mxu0 0.0
        %1026 = vmatprep.subr.mxu0 0.0
        %1027 = vmatpush1.msra.mxu0 0.0
        %1028 = vmatprep.subr.mxu0 0.0
        %1029 = vmatpush1.msra.mxu0 0.0
        %1030 = vmatprep.subr.mxu0 0.0
        %1031 = vmatpush1.msra.mxu0 0.0
        %1032 = vmatprep.subr.mxu0 0.0
        %1033 = vmatpush1.msra.mxu0 0.0
        %1034 = vmatprep.subr.mxu0 0.0
        %1035 = vmatpush1.msra.mxu0 0.0
        %1036 = vmatprep.subr.mxu0 0.0
        %1037 = vmatpush1.msra.mxu0 0.0
        %1038 = vmatprep.subr.mxu0 0.0
        %1039 = vmatpush1.msra.mxu0 0.0
        %1040 = vmatprep.subr.mxu0 0.0
        %1041 = vmatpush1.msra.mxu0 0.0
        %1042 = vmatprep.subr.mxu0 0.0
        %1043 = vmatpush1.msra.mxu0 0.0
        %1044 = vmatprep.subr.mxu0 0.0
        %1045 = vmatpush1.msra.mxu0 0.0
        %1046 = vmatprep.subr.mxu0 0.0
        %1047 = vmatpush1.msra.mxu0 0.0
        %1048 = vmatprep.subr.mxu0 0.0
        %1049 = vmatpush1.msra.mxu0 0.0
        %1050 = vmatprep.subr.mxu0 0.0
        %1051 = vmatpush1.msra.mxu0 0.0
        %1052 = vmatprep.subr.mxu0 0.0
        %1053 = vmatpush1.msra.mxu0 0.0
        %1054 = vmatprep.subr.mxu0 0.0
        %1055 = vmatpush1.msra.mxu0 0.0
        %1056 = vmatprep.subr.mxu0 0.0
        %1057 = vmatpush1.msra.mxu0 0.0
        %1058 = vmatprep.subr.mxu0 0.0
        %1059 = vmatpush1.msra.mxu0 0.0
        %1060 = vmatprep.subr.mxu0 0.0
        %1061 = vmatpush1.msra.mxu0 0.0
        %1062 = vmatprep.subr.mxu0 0.0
        %1063 = vmatpush1.msra.mxu0 0.0
        %1064 = vmatprep.subr.mxu0 0.0
        %1065 = vmatpush1.msra.mxu0 0.0
        %1066 = vmatprep.subr.mxu0 0.0
        %1067 = vmatpush1.msra.mxu0 0.0
        %1068 = vmatprep.subr.mxu0 0.0
        %1069 = vmatpush1.msra.mxu0 0.0
        %1070 = vmatprep.subr.mxu0 0.0
        %1071 = vmatpush1.msra.mxu0 0.0
        %1072 = vmatprep.mubr.f32.mxu0 0.0
        %1073 = vmatmul.mubr.f32.gmra.mrb[0].mxu0 %v991
        %v1074 = vpop.f32.mrb[0].mxu0
        %v1075 = vadd.f32 0.0, %v1074
        %v1076 = vpop.f32.mrb[0].mxu0
        %1077 = vmatprep.mubr.f32.mxu0 0.0
        %1078 = vmatmul.mubr.f32.gmra.mrb[0].mxu0 %v994
        %v1079 = vpop.f32.mrb[0].mxu0
        %v1080 = vadd.f32 0.0, %v1079
        %v1081 = vpop.f32.mrb[0].mxu0
        %1082 = vmatprep.mubr.f32.mxu0 0.0
        %1083 = vmatmul.mubr.f32.gmra.mrb[0].mxu0 %v997
        %v1084 = vpop.f32.mrb[0].mxu0
        %v1085 = vadd.f32 0.0, %v1084
        %v1086 = vpop.f32.mrb[0].mxu0
        %1087 = vmatprep.mubr.f32.mxu0 0.0
        %1088 = vmatmul.mubr.f32.gmra.mrb[0].mxu0 %v1000
        %v1089 = vpop.f32.mrb[0].mxu0
        %v1090 = vadd.f32 0.0, %v1089
        %v1091 = vpop.f32.mrb[0].mxu0
        %1092 = vmatprep.mubr.f32.mxu0 0.0
        %1093 = vmatmul.mubr.f32.gmra.mrb[0].mxu0 %v1003
        %v1094 = vpop.f32.mrb[0].mxu0
        %v1095 = vadd.f32 0.0, %v1094
        %v1096 = vpop.f32.mrb[0].mxu0
        %1097 = vmatprep.mubr.f32.mxu0 0.0
        %1098 = vmatmul.mubr.f32.gmra.mrb[0].mxu0 %v1006
        %v1099 = vpop.f32.mrb[0].mxu0
        %v1100 = vadd.f32 0.0, %v1099
        %v1101 = vpop.f32.mrb[0].mxu0
        %1102 = vdwg.mxu0
        %1103 = vmatprep.subr.mxu0 0.0
        %1104 = vmatpush1.msra.mxu0 %v1075
        %1105 = vmatprep.subr.mxu0 0.0
        %1106 = vmatpush1.msra.mxu0 %v1080
        %1107 = vmatprep.subr.mxu0 0.0
        %1108 = vmatpush1.msra.mxu0 0.0
        %1109 = vmatprep.subr.mxu0 0.0
        %1110 = vmatpush1.msra.mxu0 0.0
        %1111 = vmatprep.subr.mxu0 0.0
        %1112 = vmatpush1.msra.mxu0 0.0
        %1113 = vmatprep.subr.mxu0 0.0
        %1114 = vmatpush1.msra.mxu0 0.0
        %1115 = vmatprep.subr.mxu0 0.0
        %1116 = vmatpush1.msra.mxu0 0.0
        %1117 = vmatprep.subr.mxu0 0.0
        %1118 = vmatpush1.msra.mxu0 0.0
        %1119 = vmatprep.subr.mxu0 0.0
        %1120 = vmatpush1.msra.mxu0 0.0
        %1121 = vmatprep.subr.mxu0 0.0
        %1122 = vmatpush1.msra.mxu0 0.0
        %1123 = vmatprep.subr.mxu0 0.0
        %1124 = vmatpush1.msra.mxu0 0.0
        %1125 = vmatprep.subr.mxu0 0.0
        %1126 = vmatpush1.msra.mxu0 0.0
        %1127 = vmatprep.subr.mxu0 0.0
        %1128 = vmatpush1.msra.mxu0 0.0
        %1129 = vmatprep.subr.mxu0 0.0
        %1130 = vmatpush1.msra.mxu0 0.0
        %1131 = vmatprep.subr.mxu0 0.0
        %1132 = vmatpush1.msra.mxu0 0.0
        %1133 = vmatprep.subr.mxu0 0.0
        %1134 = vmatpush1.msra.mxu0 0.0
        %1135 = vmatprep.subr.mxu0 0.0
        %1136 = vmatpush1.msra.mxu0 0.0
        %1137 = vmatprep.subr.mxu0 0.0
        %1138 = vmatpush1.msra.mxu0 0.0
        %1139 = vmatprep.subr.mxu0 0.0
        %1140 = vmatpush1.msra.mxu0 0.0
        %1141 = vmatprep.subr.mxu0 0.0
        %1142 = vmatpush1.msra.mxu0 0.0
        %1143 = vmatprep.subr.mxu0 0.0
        %1144 = vmatpush1.msra.mxu0 0.0
        %1145 = vmatprep.subr.mxu0 0.0
        %1146 = vmatpush1.msra.mxu0 0.0
        %1147 = vmatprep.subr.mxu0 0.0
        %1148 = vmatpush1.msra.mxu0 0.0
        %1149 = vmatprep.subr.mxu0 0.0
        %1150 = vmatpush1.msra.mxu0 0.0
        %1151 = vmatprep.subr.mxu0 0.0
        %1152 = vmatpush1.msra.mxu0 0.0
        %1153 = vmatprep.subr.mxu0 0.0
        %1154 = vmatpush1.msra.mxu0 0.0
        %1155 = vmatprep.subr.mxu0 0.0
        %1156 = vmatpush1.msra.mxu0 0.0
        %1157 = vmatprep.subr.mxu0 0.0
        %1158 = vmatpush1.msra.mxu0 0.0
        %1159 = vmatprep.subr.mxu0 0.0
        %1160 = vmatpush1.msra.mxu0 0.0
        %1161 = vmatprep.subr.mxu0 0.0
        %1162 = vmatpush1.msra.mxu0 0.0
        %1163 = vmatprep.subr.mxu0 0.0
        %1164 = vmatpush1.msra.mxu0 0.0
        %1165 = vmatprep.subr.mxu0 0.0
        %1166 = vmatpush1.msra.mxu0 0.0
        %1167 = vmatprep.mubr.f32.mxu0 0.0
        %1168 = vmatmul.mubr.f32.gmra.mrb[0].mxu0 %v416
        %v1169 = vpop.f32.mrb[0].mxu0
        %v1170 = vadd.f32 0.0, %v1169
        %v1171 = vpop.f32.mrb[0].mxu0
        %1172 = vmatprep.mubr.f32.mxu0 0.0
        %1173 = vmatmul.mubr.f32.gmra.mrb[0].mxu0 %v419
        %v1174 = vpop.f32.mrb[0].mxu0
        %v1175 = vadd.f32 0.0, %v1174
        %v1176 = vpop.f32.mrb[0].mxu0
        %1177 = vdwg.mxu0
        %1178 = vmatprep.subr.mxu0 0.0
        %1179 = vmatpush1.msra.mxu0 %v1085
        %1180 = vmatprep.subr.mxu0 0.0
        %1181 = vmatpush1.msra.mxu0 %v1090
        %1182 = vmatprep.subr.mxu0 0.0
        %1183 = vmatpush1.msra.mxu0 0.0
        %1184 = vmatprep.subr.mxu0 0.0
        %1185 = vmatpush1.msra.mxu0 0.0
        %1186 = vmatprep.subr.mxu0 0.0
        %1187 = vmatpush1.msra.mxu0 0.0
        %1188 = vmatprep.subr.mxu0 0.0
        %1189 = vmatpush1.msra.mxu0 0.0
        %1190 = vmatprep.subr.mxu0 0.0
        %1191 = vmatpush1.msra.mxu0 0.0
        %1192 = vmatprep.subr.mxu0 0.0
        %1193 = vmatpush1.msra.mxu0 0.0
        %1194 = vmatprep.subr.mxu0 0.0
        %1195 = vmatpush1.msra.mxu0 0.0
        %1196 = vmatprep.subr.mxu0 0.0
        %1197 = vmatpush1.msra.mxu0 0.0
        %1198 = vmatprep.subr.mxu0 0.0
        %1199 = vmatpush1.msra.mxu0 0.0
        %1200 = vmatprep.subr.mxu0 0.0
        %1201 = vmatpush1.msra.mxu0 0.0
        %1202 = vmatprep.subr.mxu0 0.0
        %1203 = vmatpush1.msra.mxu0 0.0
        %1204 = vmatprep.subr.mxu0 0.0
        %1205 = vmatpush1.msra.mxu0 0.0
        %1206 = vmatprep.subr.mxu0 0.0
        %1207 = vmatpush1.msra.mxu0 0.0
        %1208 = vmatprep.subr.mxu0 0.0
        %1209 = vmatpush1.msra.mxu0 0.0
        %1210 = vmatprep.subr.mxu0 0.0
        %1211 = vmatpush1.msra.mxu0 0.0
        %1212 = vmatprep.subr.mxu0 0.0
        %1213 = vmatpush1.msra.mxu0 0.0
        %1214 = vmatprep.subr.mxu0 0.0
        %1215 = vmatpush1.msra.mxu0 0.0
        %1216 = vmatprep.subr.mxu0 0.0
        %1217 = vmatpush1.msra.mxu0 0.0
        %1218 = vmatprep.subr.mxu0 0.0
        %1219 = vmatpush1.msra.mxu0 0.0
        %1220 = vmatprep.subr.mxu0 0.0
        %1221 = vmatpush1.msra.mxu0 0.0
        %1222 = vmatprep.subr.mxu0 0.0
        %1223 = vmatpush1.msra.mxu0 0.0
        %1224 = vmatprep.subr.mxu0 0.0
        %1225 = vmatpush1.msra.mxu0 0.0
        %1226 = vmatprep.subr.mxu0 0.0
        %1227 = vmatpush1.msra.mxu0 0.0
        %1228 = vmatprep.subr.mxu0 0.0
        %1229 = vmatpush1.msra.mxu0 0.0
        %1230 = vmatprep.subr.mxu0 0.0
        %1231 = vmatpush1.msra.mxu0 0.0
        %1232 = vmatprep.subr.mxu0 0.0
        %1233 = vmatpush1.msra.mxu0 0.0
        %1234 = vmatprep.subr.mxu0 0.0
        %1235 = vmatpush1.msra.mxu0 0.0
        %1236 = vmatprep.subr.mxu0 0.0
        %1237 = vmatpush1.msra.mxu0 0.0
        %1238 = vmatprep.subr.mxu0 0.0
        %1239 = vmatpush1.msra.mxu0 0.0
        %1240 = vmatprep.subr.mxu0 0.0
        %1241 = vmatpush1.msra.mxu0 0.0
        %1242 = vmatprep.mubr.f32.mxu0 0.0
        %1243 = vmatmul.mubr.f32.gmra.mrb[0].mxu0 %v416
        %v1244 = vpop.f32.mrb[0].mxu0
        %v1245 = vadd.f32 0.0, %v1244
        %v1246 = vpop.f32.mrb[0].mxu0
        %1247 = vmatprep.mubr.f32.mxu0 0.0
        %1248 = vmatmul.mubr.f32.gmra.mrb[0].mxu0 %v419
        %v1249 = vpop.f32.mrb[0].mxu0
        %v1250 = vadd.f32 0.0, %v1249
        %v1251 = vpop.f32.mrb[0].mxu0
        %1252 = vdwg.mxu0
        %1253 = vmatprep.subr.mxu0 0.0
        %1254 = vmatpush1.msra.mxu0 %v1095
        %1255 = vmatprep.subr.mxu0 0.0
        %1256 = vmatpush1.msra.mxu0 %v1100
        %1257 = vmatprep.subr.mxu0 0.0
        %1258 = vmatpush1.msra.mxu0 0.0
        %1259 = vmatprep.subr.mxu0 0.0
        %1260 = vmatpush1.msra.mxu0 0.0
        %1261 = vmatprep.subr.mxu0 0.0
        %1262 = vmatpush1.msra.mxu0 0.0
        %1263 = vmatprep.subr.mxu0 0.0
        %1264 = vmatpush1.msra.mxu0 0.0
        %1265 = vmatprep.subr.mxu0 0.0
        %1266 = vmatpush1.msra.mxu0 0.0
        %1267 = vmatprep.subr.mxu0 0.0
        %1268 = vmatpush1.msra.mxu0 0.0
        %1269 = vmatprep.subr.mxu0 0.0
        %1270 = vmatpush1.msra.mxu0 0.0
        %1271 = vmatprep.subr.mxu0 0.0
        %1272 = vmatpush1.msra.mxu0 0.0
        %1273 = vmatprep.subr.mxu0 0.0
        %1274 = vmatpush1.msra.mxu0 0.0
        %1275 = vmatprep.subr.mxu0 0.0
        %1276 = vmatpush1.msra.mxu0 0.0
        %1277 = vmatprep.subr.mxu0 0.0
        %1278 = vmatpush1.msra.mxu0 0.0
        %1279 = vmatprep.subr.mxu0 0.0
        %1280 = vmatpush1.msra.mxu0 0.0
        %1281 = vmatprep.subr.mxu0 0.0
        %1282 = vmatpush1.msra.mxu0 0.0
        %1283 = vmatprep.subr.mxu0 0.0
        %1284 = vmatpush1.msra.mxu0 0.0
        %1285 = vmatprep.subr.mxu0 0.0
        %1286 = vmatpush1.msra.mxu0 0.0
        %1287 = vmatprep.subr.mxu0 0.0
        %1288 = vmatpush1.msra.mxu0 0.0
        %1289 = vmatprep.subr.mxu0 0.0
        %1290 = vmatpush1.msra.mxu0 0.0
        %1291 = vmatprep.subr.mxu0 0.0
        %1292 = vmatpush1.msra.mxu0 0.0
        %1293 = vmatprep.subr.mxu0 0.0
        %1294 = vmatpush1.msra.mxu0 0.0
        %1295 = vmatprep.subr.mxu0 0.0
        %1296 = vmatpush1.msra.mxu0 0.0
        %1297 = vmatprep.subr.mxu0 0.0
        %1298 = vmatpush1.msra.mxu0 0.0
        %1299 = vmatprep.subr.mxu0 0.0
        %1300 = vmatpush1.msra.mxu0 0.0
        %1301 = vmatprep.subr.mxu0 0.0
        %1302 = vmatpush1.msra.mxu0 0.0
        %1303 = vmatprep.subr.mxu0 0.0
        %1304 = vmatpush1.msra.mxu0 0.0
        %1305 = vmatprep.subr.mxu0 0.0
        %1306 = vmatpush1.msra.mxu0 0.0
        %1307 = vmatprep.subr.mxu0 0.0
        %1308 = vmatpush1.msra.mxu0 0.0
        %1309 = vmatprep.subr.mxu0 0.0
        %1310 = vmatpush1.msra.mxu0 0.0
        %1311 = vmatprep.subr.mxu0 0.0
        %1312 = vmatpush1.msra.mxu0 0.0
        %1313 = vmatprep.subr.mxu0 0.0
        %1314 = vmatpush1.msra.mxu0 0.0
        %1315 = vmatprep.subr.mxu0 0.0
        %1316 = vmatpush1.msra.mxu0 0.0
        %1317 = vmatprep.mubr.f32.mxu0 0.0
        %1318 = vmatmul.mubr.f32.gmra.mrb[0].mxu0 %v416
        %v1319 = vpop.f32.mrb[0].mxu0
        %v1320 = vadd.f32 0.0, %v1319
        %v1321 = vpop.f32.mrb[0].mxu0
        %1322 = vmatprep.mubr.f32.mxu0 0.0
        %1323 = vmatmul.mubr.f32.gmra.mrb[0].mxu0 %v419
        %v1324 = vpop.f32.mrb[0].mxu0
        %v1325 = vadd.f32 0.0, %v1324
        %v1326 = vpop.f32.mrb[0].mxu0
        %1327 = vdwg.mxu0
        %v1328 = vmul.f32 %v291, %v291
        %v1329 = vmul.f32 %v292, %v292
        %v1330 = vmul.f32 %v293, %v293
        %v1331 = vmul.f32 %v294, %v294
        %v1332 = vmul.f32 %v295, %v295
        %v1333 = vmul.f32 %v296, %v296
        %v1335 = vsel %vm301, %v1328, 0
        %v1338 = vsel %vm301, %v1329, 0
        %v1341 = vsel %vm301, %v1330, 0
        %v1344 = vsel %vm301, %v1331, 0
        %v1347 = vsel %vm301, %v1332, 0
        %v1350 = vsel %vm301, %v1333, 0
        %1352 = vmatprep.subr.mxu0 0.0
        %1353 = vmatpush1.msra.mxu0 %v299
        %1354 = vmatprep.subr.mxu0 0.0
        %1355 = vmatpush1.msra.mxu0 %v300
        %1356 = vmatprep.subr.mxu0 0.0
        %1357 = vmatpush1.msra.mxu0 0.0
        %1358 = vmatprep.subr.mxu0 0.0
        %1359 = vmatpush1.msra.mxu0 0.0
        %1360 = vmatprep.subr.mxu0 0.0
        %1361 = vmatpush1.msra.mxu0 0.0
        %1362 = vmatprep.subr.mxu0 0.0
        %1363 = vmatpush1.msra.mxu0 0.0
        %1364 = vmatprep.subr.mxu0 0.0
        %1365 = vmatpush1.msra.mxu0 0.0
        %1366 = vmatprep.subr.mxu0 0.0
        %1367 = vmatpush1.msra.mxu0 0.0
        %1368 = vmatprep.subr.mxu0 0.0
        %1369 = vmatpush1.msra.mxu0 0.0
        %1370 = vmatprep.subr.mxu0 0.0
        %1371 = vmatpush1.msra.mxu0 0.0
        %1372 = vmatprep.subr.mxu0 0.0
        %1373 = vmatpush1.msra.mxu0 0.0
        %1374 = vmatprep.subr.mxu0 0.0
        %1375 = vmatpush1.msra.mxu0 0.0
        %1376 = vmatprep.subr.mxu0 0.0
        %1377 = vmatpush1.msra.mxu0 0.0
        %1378 = vmatprep.subr.mxu0 0.0
        %1379 = vmatpush1.msra.mxu0 0.0
        %1380 = vmatprep.subr.mxu0 0.0
        %1381 = vmatpush1.msra.mxu0 0.0
        %1382 = vmatprep.subr.mxu0 0.0
        %1383 = vmatpush1.msra.mxu0 0.0
        %1384 = vmatprep.subr.mxu0 0.0
        %1385 = vmatpush1.msra.mxu0 0.0
        %1386 = vmatprep.subr.mxu0 0.0
        %1387 = vmatpush1.msra.mxu0 0.0
        %1388 = vmatprep.subr.mxu0 0.0
        %1389 = vmatpush1.msra.mxu0 0.0
        %1390 = vmatprep.subr.mxu0 0.0
        %1391 = vmatpush1.msra.mxu0 0.0
        %1392 = vmatprep.subr.mxu0 0.0
        %1393 = vmatpush1.msra.mxu0 0.0
        %1394 = vmatprep.subr.mxu0 0.0
        %1395 = vmatpush1.msra.mxu0 0.0
        %1396 = vmatprep.subr.mxu0 0.0
        %1397 = vmatpush1.msra.mxu0 0.0
        %1398 = vmatprep.subr.mxu0 0.0
        %1399 = vmatpush1.msra.mxu0 0.0
        %1400 = vmatprep.subr.mxu0 0.0
        %1401 = vmatpush1.msra.mxu0 0.0
        %1402 = vmatprep.subr.mxu0 0.0
        %1403 = vmatpush1.msra.mxu0 0.0
        %1404 = vmatprep.subr.mxu0 0.0
        %1405 = vmatpush1.msra.mxu0 0.0
        %1406 = vmatprep.subr.mxu0 0.0
        %1407 = vmatpush1.msra.mxu0 0.0
        %1408 = vmatprep.subr.mxu0 0.0
        %1409 = vmatpush1.msra.mxu0 0.0
        %1410 = vmatprep.subr.mxu0 0.0
        %1411 = vmatpush1.msra.mxu0 0.0
        %1412 = vmatprep.subr.mxu0 0.0
        %1413 = vmatpush1.msra.mxu0 0.0
        %1414 = vmatprep.subr.mxu0 0.0
        %1415 = vmatpush1.msra.mxu0 0.0
        %1416 = vmatprep.mubr.f32.mxu0 0.0
        %1417 = vmatmul.mubr.f32.gmra.mrb[0].mxu0 %v1335
        %v1418 = vpop.f32.mrb[0].mxu0
        %v1419 = vadd.f32 0.0, %v1418
        %v1420 = vpop.f32.mrb[0].mxu0
        %1421 = vmatprep.mubr.f32.mxu0 0.0
        %1422 = vmatmul.mubr.f32.gmra.mrb[0].mxu0 %v1338
        %v1423 = vpop.f32.mrb[0].mxu0
        %v1424 = vadd.f32 0.0, %v1423
        %v1425 = vpop.f32.mrb[0].mxu0
        %1426 = vmatprep.mubr.f32.mxu0 0.0
        %1427 = vmatmul.mubr.f32.gmra.mrb[0].mxu0 %v1341
        %v1428 = vpop.f32.mrb[0].mxu0
        %v1429 = vadd.f32 0.0, %v1428
        %v1430 = vpop.f32.mrb[0].mxu0
        %1431 = vmatprep.mubr.f32.mxu0 0.0
        %1432 = vmatmul.mubr.f32.gmra.mrb[0].mxu0 %v1344
        %v1433 = vpop.f32.mrb[0].mxu0
        %v1434 = vadd.f32 0.0, %v1433
        %v1435 = vpop.f32.mrb[0].mxu0
        %1436 = vmatprep.mubr.f32.mxu0 0.0
        %1437 = vmatmul.mubr.f32.gmra.mrb[0].mxu0 %v1347
        %v1438 = vpop.f32.mrb[0].mxu0
        %v1439 = vadd.f32 0.0, %v1438
        %v1440 = vpop.f32.mrb[0].mxu0
        %1441 = vmatprep.mubr.f32.mxu0 0.0
        %1442 = vmatmul.mubr.f32.gmra.mrb[0].mxu0 %v1350
        %v1443 = vpop.f32.mrb[0].mxu0
        %v1444 = vadd.f32 0.0, %v1443
        %v1445 = vpop.f32.mrb[0].mxu0
        %1446 = vdwg.mxu0
        %1447 = vmatprep.subr.mxu0 0.0
        %1448 = vmatpush1.msra.mxu0 %v1419
        %1449 = vmatprep.subr.mxu0 0.0
        %1450 = vmatpush1.msra.mxu0 %v1424
        %1451 = vmatprep.subr.mxu0 0.0
        %1452 = vmatpush1.msra.mxu0 0.0
        %1453 = vmatprep.subr.mxu0 0.0
        %1454 = vmatpush1.msra.mxu0 0.0
        %1455 = vmatprep.subr.mxu0 0.0
        %1456 = vmatpush1.msra.mxu0 0.0
        %1457 = vmatprep.subr.mxu0 0.0
        %1458 = vmatpush1.msra.mxu0 0.0
        %1459 = vmatprep.subr.mxu0 0.0
        %1460 = vmatpush1.msra.mxu0 0.0
        %1461 = vmatprep.subr.mxu0 0.0
        %1462 = vmatpush1.msra.mxu0 0.0
        %1463 = vmatprep.subr.mxu0 0.0
        %1464 = vmatpush1.msra.mxu0 0.0
        %1465 = vmatprep.subr.mxu0 0.0
        %1466 = vmatpush1.msra.mxu0 0.0
        %1467 = vmatprep.subr.mxu0 0.0
        %1468 = vmatpush1.msra.mxu0 0.0
        %1469 = vmatprep.subr.mxu0 0.0
        %1470 = vmatpush1.msra.mxu0 0.0
        %1471 = vmatprep.subr.mxu0 0.0
        %1472 = vmatpush1.msra.mxu0 0.0
        %1473 = vmatprep.subr.mxu0 0.0
        %1474 = vmatpush1.msra.mxu0 0.0
        %1475 = vmatprep.subr.mxu0 0.0
        %1476 = vmatpush1.msra.mxu0 0.0
        %1477 = vmatprep.subr.mxu0 0.0
        %1478 = vmatpush1.msra.mxu0 0.0
        %1479 = vmatprep.subr.mxu0 0.0
        %1480 = vmatpush1.msra.mxu0 0.0
        %1481 = vmatprep.subr.mxu0 0.0
        %1482 = vmatpush1.msra.mxu0 0.0
        %1483 = vmatprep.subr.mxu0 0.0
        %1484 = vmatpush1.msra.mxu0 0.0
        %1485 = vmatprep.subr.mxu0 0.0
        %1486 = vmatpush1.msra.mxu0 0.0
        %1487 = vmatprep.subr.mxu0 0.0
        %1488 = vmatpush1.msra.mxu0 0.0
        %1489 = vmatprep.subr.mxu0 0.0
        %1490 = vmatpush1.msra.mxu0 0.0
        %1491 = vmatprep.subr.mxu0 0.0
        %1492 = vmatpush1.msra.mxu0 0.0
        %1493 = vmatprep.subr.mxu0 0.0
        %1494 = vmatpush1.msra.mxu0 0.0
        %1495 = vmatprep.subr.mxu0 0.0
        %1496 = vmatpush1.msra.mxu0 0.0
        %1497 = vmatprep.subr.mxu0 0.0
        %1498 = vmatpush1.msra.mxu0 0.0
        %1499 = vmatprep.subr.mxu0 0.0
        %1500 = vmatpush1.msra.mxu0 0.0
        %1501 = vmatprep.subr.mxu0 0.0
        %1502 = vmatpush1.msra.mxu0 0.0
        %1503 = vmatprep.subr.mxu0 0.0
        %1504 = vmatpush1.msra.mxu0 0.0
        %1505 = vmatprep.subr.mxu0 0.0
        %1506 = vmatpush1.msra.mxu0 0.0
        %1507 = vmatprep.subr.mxu0 0.0
        %1508 = vmatpush1.msra.mxu0 0.0
        %1509 = vmatprep.subr.mxu0 0.0
        %1510 = vmatpush1.msra.mxu0 0.0
        %1511 = vmatprep.mubr.f32.mxu0 0.0
        %1512 = vmatmul.mubr.f32.gmra.mrb[0].mxu0 %v416
        %v1513 = vpop.f32.mrb[0].mxu0
        %v1514 = vadd.f32 0.0, %v1513
        %v1515 = vpop.f32.mrb[0].mxu0
        %1516 = vmatprep.mubr.f32.mxu0 0.0
        %1517 = vmatmul.mubr.f32.gmra.mrb[0].mxu0 %v419
        %v1518 = vpop.f32.mrb[0].mxu0
        %v1519 = vadd.f32 0.0, %v1518
        %v1520 = vpop.f32.mrb[0].mxu0
        %1521 = vdwg.mxu0
        %1522 = vmatprep.subr.mxu0 0.0
        %1523 = vmatpush1.msra.mxu0 %v1429
        %1524 = vmatprep.subr.mxu0 0.0
        %1525 = vmatpush1.msra.mxu0 %v1434
        %1526 = vmatprep.subr.mxu0 0.0
        %1527 = vmatpush1.msra.mxu0 0.0
        %1528 = vmatprep.subr.mxu0 0.0
        %1529 = vmatpush1.msra.mxu0 0.0
        %1530 = vmatprep.subr.mxu0 0.0
        %1531 = vmatpush1.msra.mxu0 0.0
        %1532 = vmatprep.subr.mxu0 0.0
        %1533 = vmatpush1.msra.mxu0 0.0
        %1534 = vmatprep.subr.mxu0 0.0
        %1535 = vmatpush1.msra.mxu0 0.0
        %1536 = vmatprep.subr.mxu0 0.0
        %1537 = vmatpush1.msra.mxu0 0.0
        %1538 = vmatprep.subr.mxu0 0.0
        %1539 = vmatpush1.msra.mxu0 0.0
        %1540 = vmatprep.subr.mxu0 0.0
        %1541 = vmatpush1.msra.mxu0 0.0
        %1542 = vmatprep.subr.mxu0 0.0
        %1543 = vmatpush1.msra.mxu0 0.0
        %1544 = vmatprep.subr.mxu0 0.0
        %1545 = vmatpush1.msra.mxu0 0.0
        %1546 = vmatprep.subr.mxu0 0.0
        %1547 = vmatpush1.msra.mxu0 0.0
        %1548 = vmatprep.subr.mxu0 0.0
        %1549 = vmatpush1.msra.mxu0 0.0
        %1550 = vmatprep.subr.mxu0 0.0
        %1551 = vmatpush1.msra.mxu0 0.0
        %1552 = vmatprep.subr.mxu0 0.0
        %1553 = vmatpush1.msra.mxu0 0.0
        %1554 = vmatprep.subr.mxu0 0.0
        %1555 = vmatpush1.msra.mxu0 0.0
        %1556 = vmatprep.subr.mxu0 0.0
        %1557 = vmatpush1.msra.mxu0 0.0
        %1558 = vmatprep.subr.mxu0 0.0
        %1559 = vmatpush1.msra.mxu0 0.0
        %1560 = vmatprep.subr.mxu0 0.0
        %1561 = vmatpush1.msra.mxu0 0.0
        %1562 = vmatprep.subr.mxu0 0.0
        %1563 = vmatpush1.msra.mxu0 0.0
        %1564 = vmatprep.subr.mxu0 0.0
        %1565 = vmatpush1.msra.mxu0 0.0
        %1566 = vmatprep.subr.mxu0 0.0
        %1567 = vmatpush1.msra.mxu0 0.0
        %1568 = vmatprep.subr.mxu0 0.0
        %1569 = vmatpush1.msra.mxu0 0.0
        %1570 = vmatprep.subr.mxu0 0.0
        %1571 = vmatpush1.msra.mxu0 0.0
        %1572 = vmatprep.subr.mxu0 0.0
        %1573 = vmatpush1.msra.mxu0 0.0
        %1574 = vmatprep.subr.mxu0 0.0
        %1575 = vmatpush1.msra.mxu0 0.0
        %1576 = vmatprep.subr.mxu0 0.0
        %1577 = vmatpush1.msra.mxu0 0.0
        %1578 = vmatprep.subr.mxu0 0.0
        %1579 = vmatpush1.msra.mxu0 0.0
        %1580 = vmatprep.subr.mxu0 0.0
        %1581 = vmatpush1.msra.mxu0 0.0
        %1582 = vmatprep.subr.mxu0 0.0
        %1583 = vmatpush1.msra.mxu0 0.0
        %1584 = vmatprep.subr.mxu0 0.0
        %1585 = vmatpush1.msra.mxu0 0.0
        %1586 = vmatprep.mubr.f32.mxu0 0.0
        %1587 = vmatmul.mubr.f32.gmra.mrb[0].mxu0 %v416
        %v1588 = vpop.f32.mrb[0].mxu0
        %v1589 = vadd.f32 0.0, %v1588
        %v1590 = vpop.f32.mrb[0].mxu0
        %1591 = vmatprep.mubr.f32.mxu0 0.0
        %1592 = vmatmul.mubr.f32.gmra.mrb[0].mxu0 %v419
        %v1593 = vpop.f32.mrb[0].mxu0
        %v1594 = vadd.f32 0.0, %v1593
        %v1595 = vpop.f32.mrb[0].mxu0
        %1596 = vdwg.mxu0
        %1597 = vmatprep.subr.mxu0 0.0
        %1598 = vmatpush1.msra.mxu0 %v1439
        %1599 = vmatprep.subr.mxu0 0.0
        %1600 = vmatpush1.msra.mxu0 %v1444
        %1601 = vmatprep.subr.mxu0 0.0
        %1602 = vmatpush1.msra.mxu0 0.0
        %1603 = vmatprep.subr.mxu0 0.0
        %1604 = vmatpush1.msra.mxu0 0.0
        %1605 = vmatprep.subr.mxu0 0.0
        %1606 = vmatpush1.msra.mxu0 0.0
        %1607 = vmatprep.subr.mxu0 0.0
        %1608 = vmatpush1.msra.mxu0 0.0
        %1609 = vmatprep.subr.mxu0 0.0
        %1610 = vmatpush1.msra.mxu0 0.0
        %1611 = vmatprep.subr.mxu0 0.0
        %1612 = vmatpush1.msra.mxu0 0.0
        %1613 = vmatprep.subr.mxu0 0.0
        %1614 = vmatpush1.msra.mxu0 0.0
        %1615 = vmatprep.subr.mxu0 0.0
        %1616 = vmatpush1.msra.mxu0 0.0
        %1617 = vmatprep.subr.mxu0 0.0
        %1618 = vmatpush1.msra.mxu0 0.0
        %1619 = vmatprep.subr.mxu0 0.0
        %1620 = vmatpush1.msra.mxu0 0.0
        %1621 = vmatprep.subr.mxu0 0.0
        %1622 = vmatpush1.msra.mxu0 0.0
        %1623 = vmatprep.subr.mxu0 0.0
        %1624 = vmatpush1.msra.mxu0 0.0
        %1625 = vmatprep.subr.mxu0 0.0
        %1626 = vmatpush1.msra.mxu0 0.0
        %1627 = vmatprep.subr.mxu0 0.0
        %1628 = vmatpush1.msra.mxu0 0.0
        %1629 = vmatprep.subr.mxu0 0.0
        %1630 = vmatpush1.msra.mxu0 0.0
        %1631 = vmatprep.subr.mxu0 0.0
        %1632 = vmatpush1.msra.mxu0 0.0
        %1633 = vmatprep.subr.mxu0 0.0
        %1634 = vmatpush1.msra.mxu0 0.0
        %1635 = vmatprep.subr.mxu0 0.0
        %1636 = vmatpush1.msra.mxu0 0.0
        %1637 = vmatprep.subr.mxu0 0.0
        %1638 = vmatpush1.msra.mxu0 0.0
        %1639 = vmatprep.subr.mxu0 0.0
        %1640 = vmatpush1.msra.mxu0 0.0
        %1641 = vmatprep.subr.mxu0 0.0
        %1642 = vmatpush1.msra.mxu0 0.0
        %1643 = vmatprep.subr.mxu0 0.0
        %1644 = vmatpush1.msra.mxu0 0.0
        %1645 = vmatprep.subr.mxu0 0.0
        %1646 = vmatpush1.msra.mxu0 0.0
        %1647 = vmatprep.subr.mxu0 0.0
        %1648 = vmatpush1.msra.mxu0 0.0
        %1649 = vmatprep.subr.mxu0 0.0
        %1650 = vmatpush1.msra.mxu0 0.0
        %1651 = vmatprep.subr.mxu0 0.0
        %1652 = vmatpush1.msra.mxu0 0.0
        %1653 = vmatprep.subr.mxu0 0.0
        %1654 = vmatpush1.msra.mxu0 0.0
        %1655 = vmatprep.subr.mxu0 0.0
        %1656 = vmatpush1.msra.mxu0 0.0
        %1657 = vmatprep.subr.mxu0 0.0
        %1658 = vmatpush1.msra.mxu0 0.0
        %1659 = vmatprep.subr.mxu0 0.0
        %1660 = vmatpush1.msra.mxu0 0.0
        %1661 = vmatprep.mubr.f32.mxu0 0.0
        %1662 = vmatmul.mubr.f32.gmra.mrb[0].mxu0 %v416
        %v1663 = vpop.f32.mrb[0].mxu0
        %v1664 = vadd.f32 0.0, %v1663
        %v1665 = vpop.f32.mrb[0].mxu0
        %1666 = vmatprep.mubr.f32.mxu0 0.0
        %1667 = vmatmul.mubr.f32.gmra.mrb[0].mxu0 %v419
        %v1668 = vpop.f32.mrb[0].mxu0
        %v1669 = vadd.f32 0.0, %v1668
        %v1670 = vpop.f32.mrb[0].mxu0
        %1671 = vdwg.mxu0
        %v1672 = vmul.f32 %v285, %v291
        %v1673 = vmul.f32 %v286, %v292
        %v1674 = vmul.f32 %v287, %v293
        %v1675 = vmul.f32 %v288, %v294
        %v1676 = vmul.f32 %v289, %v295
        %v1677 = vmul.f32 %v290, %v296
        %v1679 = vsel %vm301, %v1672, 0
        %v1682 = vsel %vm301, %v1673, 0
        %v1685 = vsel %vm301, %v1674, 0
        %v1688 = vsel %vm301, %v1675, 0
        %v1691 = vsel %vm301, %v1676, 0
        %v1694 = vsel %vm301, %v1677, 0
        %1696 = vmatprep.subr.mxu0 0.0
        %1697 = vmatpush1.msra.mxu0 %v299
        %1698 = vmatprep.subr.mxu0 0.0
        %1699 = vmatpush1.msra.mxu0 %v300
        %1700 = vmatprep.subr.mxu0 0.0
        %1701 = vmatpush1.msra.mxu0 0.0
        %1702 = vmatprep.subr.mxu0 0.0
        %1703 = vmatpush1.msra.mxu0 0.0
        %1704 = vmatprep.subr.mxu0 0.0
        %1705 = vmatpush1.msra.mxu0 0.0
        %1706 = vmatprep.subr.mxu0 0.0
        %1707 = vmatpush1.msra.mxu0 0.0
        %1708 = vmatprep.subr.mxu0 0.0
        %1709 = vmatpush1.msra.mxu0 0.0
        %1710 = vmatprep.subr.mxu0 0.0
        %1711 = vmatpush1.msra.mxu0 0.0
        %1712 = vmatprep.subr.mxu0 0.0
        %1713 = vmatpush1.msra.mxu0 0.0
        %1714 = vmatprep.subr.mxu0 0.0
        %1715 = vmatpush1.msra.mxu0 0.0
        %1716 = vmatprep.subr.mxu0 0.0
        %1717 = vmatpush1.msra.mxu0 0.0
        %1718 = vmatprep.subr.mxu0 0.0
        %1719 = vmatpush1.msra.mxu0 0.0
        %1720 = vmatprep.subr.mxu0 0.0
        %1721 = vmatpush1.msra.mxu0 0.0
        %1722 = vmatprep.subr.mxu0 0.0
        %1723 = vmatpush1.msra.mxu0 0.0
        %1724 = vmatprep.subr.mxu0 0.0
        %1725 = vmatpush1.msra.mxu0 0.0
        %1726 = vmatprep.subr.mxu0 0.0
        %1727 = vmatpush1.msra.mxu0 0.0
        %1728 = vmatprep.subr.mxu0 0.0
        %1729 = vmatpush1.msra.mxu0 0.0
        %1730 = vmatprep.subr.mxu0 0.0
        %1731 = vmatpush1.msra.mxu0 0.0
        %1732 = vmatprep.subr.mxu0 0.0
        %1733 = vmatpush1.msra.mxu0 0.0
        %1734 = vmatprep.subr.mxu0 0.0
        %1735 = vmatpush1.msra.mxu0 0.0
        %1736 = vmatprep.subr.mxu0 0.0
        %1737 = vmatpush1.msra.mxu0 0.0
        %1738 = vmatprep.subr.mxu0 0.0
        %1739 = vmatpush1.msra.mxu0 0.0
        %1740 = vmatprep.subr.mxu0 0.0
        %1741 = vmatpush1.msra.mxu0 0.0
        %1742 = vmatprep.subr.mxu0 0.0
        %1743 = vmatpush1.msra.mxu0 0.0
        %1744 = vmatprep.subr.mxu0 0.0
        %1745 = vmatpush1.msra.mxu0 0.0
        %1746 = vmatprep.subr.mxu0 0.0
        %1747 = vmatpush1.msra.mxu0 0.0
        %1748 = vmatprep.subr.mxu0 0.0
        %1749 = vmatpush1.msra.mxu0 0.0
        %1750 = vmatprep.subr.mxu0 0.0
        %1751 = vmatpush1.msra.mxu0 0.0
        %1752 = vmatprep.subr.mxu0 0.0
        %1753 = vmatpush1.msra.mxu0 0.0
        %1754 = vmatprep.subr.mxu0 0.0
        %1755 = vmatpush1.msra.mxu0 0.0
        %1756 = vmatprep.subr.mxu0 0.0
        %1757 = vmatpush1.msra.mxu0 0.0
        %1758 = vmatprep.subr.mxu0 0.0
        %1759 = vmatpush1.msra.mxu0 0.0
        %1760 = vmatprep.mubr.f32.mxu0 0.0
        %1761 = vmatmul.mubr.f32.gmra.mrb[0].mxu0 %v1679
        %v1762 = vpop.f32.mrb[0].mxu0
        %v1763 = vadd.f32 0.0, %v1762
        %v1764 = vpop.f32.mrb[0].mxu0
        %1765 = vmatprep.mubr.f32.mxu0 0.0
        %1766 = vmatmul.mubr.f32.gmra.mrb[0].mxu0 %v1682
        %v1767 = vpop.f32.mrb[0].mxu0
        %v1768 = vadd.f32 0.0, %v1767
        %v1769 = vpop.f32.mrb[0].mxu0
        %1770 = vmatprep.mubr.f32.mxu0 0.0
        %1771 = vmatmul.mubr.f32.gmra.mrb[0].mxu0 %v1685
        %v1772 = vpop.f32.mrb[0].mxu0
        %v1773 = vadd.f32 0.0, %v1772
        %v1774 = vpop.f32.mrb[0].mxu0
        %1775 = vmatprep.mubr.f32.mxu0 0.0
        %1776 = vmatmul.mubr.f32.gmra.mrb[0].mxu0 %v1688
        %v1777 = vpop.f32.mrb[0].mxu0
        %v1778 = vadd.f32 0.0, %v1777
        %v1779 = vpop.f32.mrb[0].mxu0
        %1780 = vmatprep.mubr.f32.mxu0 0.0
        %1781 = vmatmul.mubr.f32.gmra.mrb[0].mxu0 %v1691
        %v1782 = vpop.f32.mrb[0].mxu0
        %v1783 = vadd.f32 0.0, %v1782
        %v1784 = vpop.f32.mrb[0].mxu0
        %1785 = vmatprep.mubr.f32.mxu0 0.0
        %1786 = vmatmul.mubr.f32.gmra.mrb[0].mxu0 %v1694
        %v1787 = vpop.f32.mrb[0].mxu0
        %v1788 = vadd.f32 0.0, %v1787
        %v1789 = vpop.f32.mrb[0].mxu0
        %1790 = vdwg.mxu0
        %1791 = vmatprep.subr.mxu0 0.0
        %1792 = vmatpush1.msra.mxu0 %v1763
        %1793 = vmatprep.subr.mxu0 0.0
        %1794 = vmatpush1.msra.mxu0 %v1768
        %1795 = vmatprep.subr.mxu0 0.0
        %1796 = vmatpush1.msra.mxu0 0.0
        %1797 = vmatprep.subr.mxu0 0.0
        %1798 = vmatpush1.msra.mxu0 0.0
        %1799 = vmatprep.subr.mxu0 0.0
        %1800 = vmatpush1.msra.mxu0 0.0
        %1801 = vmatprep.subr.mxu0 0.0
        %1802 = vmatpush1.msra.mxu0 0.0
        %1803 = vmatprep.subr.mxu0 0.0
        %1804 = vmatpush1.msra.mxu0 0.0
        %1805 = vmatprep.subr.mxu0 0.0
        %1806 = vmatpush1.msra.mxu0 0.0
        %1807 = vmatprep.subr.mxu0 0.0
        %1808 = vmatpush1.msra.mxu0 0.0
        %1809 = vmatprep.subr.mxu0 0.0
        %1810 = vmatpush1.msra.mxu0 0.0
        %1811 = vmatprep.subr.mxu0 0.0
        %1812 = vmatpush1.msra.mxu0 0.0
        %1813 = vmatprep.subr.mxu0 0.0
        %1814 = vmatpush1.msra.mxu0 0.0
        %1815 = vmatprep.subr.mxu0 0.0
        %1816 = vmatpush1.msra.mxu0 0.0
        %1817 = vmatprep.subr.mxu0 0.0
        %1818 = vmatpush1.msra.mxu0 0.0
        %1819 = vmatprep.subr.mxu0 0.0
        %1820 = vmatpush1.msra.mxu0 0.0
        %1821 = vmatprep.subr.mxu0 0.0
        %1822 = vmatpush1.msra.mxu0 0.0
        %1823 = vmatprep.subr.mxu0 0.0
        %1824 = vmatpush1.msra.mxu0 0.0
        %1825 = vmatprep.subr.mxu0 0.0
        %1826 = vmatpush1.msra.mxu0 0.0
        %1827 = vmatprep.subr.mxu0 0.0
        %1828 = vmatpush1.msra.mxu0 0.0
        %1829 = vmatprep.subr.mxu0 0.0
        %1830 = vmatpush1.msra.mxu0 0.0
        %1831 = vmatprep.subr.mxu0 0.0
        %1832 = vmatpush1.msra.mxu0 0.0
        %1833 = vmatprep.subr.mxu0 0.0
        %1834 = vmatpush1.msra.mxu0 0.0
        %1835 = vmatprep.subr.mxu0 0.0
        %1836 = vmatpush1.msra.mxu0 0.0
        %1837 = vmatprep.subr.mxu0 0.0
        %1838 = vmatpush1.msra.mxu0 0.0
        %1839 = vmatprep.subr.mxu0 0.0
        %1840 = vmatpush1.msra.mxu0 0.0
        %1841 = vmatprep.subr.mxu0 0.0
        %1842 = vmatpush1.msra.mxu0 0.0
        %1843 = vmatprep.subr.mxu0 0.0
        %1844 = vmatpush1.msra.mxu0 0.0
        %1845 = vmatprep.subr.mxu0 0.0
        %1846 = vmatpush1.msra.mxu0 0.0
        %1847 = vmatprep.subr.mxu0 0.0
        %1848 = vmatpush1.msra.mxu0 0.0
        %1849 = vmatprep.subr.mxu0 0.0
        %1850 = vmatpush1.msra.mxu0 0.0
        %1851 = vmatprep.subr.mxu0 0.0
        %1852 = vmatpush1.msra.mxu0 0.0
        %1853 = vmatprep.subr.mxu0 0.0
        %1854 = vmatpush1.msra.mxu0 0.0
        %1855 = vmatprep.mubr.f32.mxu0 0.0
        %1856 = vmatmul.mubr.f32.gmra.mrb[0].mxu0 %v416
        %v1857 = vpop.f32.mrb[0].mxu0
        %v1858 = vadd.f32 0.0, %v1857
        %v1859 = vpop.f32.mrb[0].mxu0
        %1860 = vmatprep.mubr.f32.mxu0 0.0
        %1861 = vmatmul.mubr.f32.gmra.mrb[0].mxu0 %v419
        %v1862 = vpop.f32.mrb[0].mxu0
        %v1863 = vadd.f32 0.0, %v1862
        %v1864 = vpop.f32.mrb[0].mxu0
        %1865 = vdwg.mxu0
        %1866 = vmatprep.subr.mxu0 0.0
        %1867 = vmatpush1.msra.mxu0 %v1773
        %1868 = vmatprep.subr.mxu0 0.0
        %1869 = vmatpush1.msra.mxu0 %v1778
        %1870 = vmatprep.subr.mxu0 0.0
        %1871 = vmatpush1.msra.mxu0 0.0
        %1872 = vmatprep.subr.mxu0 0.0
        %1873 = vmatpush1.msra.mxu0 0.0
        %1874 = vmatprep.subr.mxu0 0.0
        %1875 = vmatpush1.msra.mxu0 0.0
        %1876 = vmatprep.subr.mxu0 0.0
        %1877 = vmatpush1.msra.mxu0 0.0
        %1878 = vmatprep.subr.mxu0 0.0
        %1879 = vmatpush1.msra.mxu0 0.0
        %1880 = vmatprep.subr.mxu0 0.0
        %1881 = vmatpush1.msra.mxu0 0.0
        %1882 = vmatprep.subr.mxu0 0.0
        %1883 = vmatpush1.msra.mxu0 0.0
        %1884 = vmatprep.subr.mxu0 0.0
        %1885 = vmatpush1.msra.mxu0 0.0
        %1886 = vmatprep.subr.mxu0 0.0
        %1887 = vmatpush1.msra.mxu0 0.0
        %1888 = vmatprep.subr.mxu0 0.0
        %1889 = vmatpush1.msra.mxu0 0.0
        %1890 = vmatprep.subr.mxu0 0.0
        %1891 = vmatpush1.msra.mxu0 0.0
        %1892 = vmatprep.subr.mxu0 0.0
        %1893 = vmatpush1.msra.mxu0 0.0
        %1894 = vmatprep.subr.mxu0 0.0
        %1895 = vmatpush1.msra.mxu0 0.0
        %1896 = vmatprep.subr.mxu0 0.0
        %1897 = vmatpush1.msra.mxu0 0.0
        %1898 = vmatprep.subr.mxu0 0.0
        %1899 = vmatpush1.msra.mxu0 0.0
        %1900 = vmatprep.subr.mxu0 0.0
        %1901 = vmatpush1.msra.mxu0 0.0
        %1902 = vmatprep.subr.mxu0 0.0
        %1903 = vmatpush1.msra.mxu0 0.0
        %1904 = vmatprep.subr.mxu0 0.0
        %1905 = vmatpush1.msra.mxu0 0.0
        %1906 = vmatprep.subr.mxu0 0.0
        %1907 = vmatpush1.msra.mxu0 0.0
        %1908 = vmatprep.subr.mxu0 0.0
        %1909 = vmatpush1.msra.mxu0 0.0
        %1910 = vmatprep.subr.mxu0 0.0
        %1911 = vmatpush1.msra.mxu0 0.0
        %1912 = vmatprep.subr.mxu0 0.0
        %1913 = vmatpush1.msra.mxu0 0.0
        %1914 = vmatprep.subr.mxu0 0.0
        %1915 = vmatpush1.msra.mxu0 0.0
        %1916 = vmatprep.subr.mxu0 0.0
        %1917 = vmatpush1.msra.mxu0 0.0
        %1918 = vmatprep.subr.mxu0 0.0
        %1919 = vmatpush1.msra.mxu0 0.0
        %1920 = vmatprep.subr.mxu0 0.0
        %1921 = vmatpush1.msra.mxu0 0.0
        %1922 = vmatprep.subr.mxu0 0.0
        %1923 = vmatpush1.msra.mxu0 0.0
        %1924 = vmatprep.subr.mxu0 0.0
        %1925 = vmatpush1.msra.mxu0 0.0
        %1926 = vmatprep.subr.mxu0 0.0
        %1927 = vmatpush1.msra.mxu0 0.0
        %1928 = vmatprep.subr.mxu0 0.0
        %1929 = vmatpush1.msra.mxu0 0.0
        %1930 = vmatprep.mubr.f32.mxu0 0.0
        %1931 = vmatmul.mubr.f32.gmra.mrb[0].mxu0 %v416
        %v1932 = vpop.f32.mrb[0].mxu0
        %v1933 = vadd.f32 0.0, %v1932
        %v1934 = vpop.f32.mrb[0].mxu0
        %1935 = vmatprep.mubr.f32.mxu0 0.0
        %1936 = vmatmul.mubr.f32.gmra.mrb[0].mxu0 %v419
        %v1937 = vpop.f32.mrb[0].mxu0
        %v1938 = vadd.f32 0.0, %v1937
        %v1939 = vpop.f32.mrb[0].mxu0
        %1940 = vdwg.mxu0
        %1941 = vmatprep.subr.mxu0 0.0
        %1942 = vmatpush1.msra.mxu0 %v1783
        %1943 = vmatprep.subr.mxu0 0.0
        %1944 = vmatpush1.msra.mxu0 %v1788
        %1945 = vmatprep.subr.mxu0 0.0
        %1946 = vmatpush1.msra.mxu0 0.0
        %1947 = vmatprep.subr.mxu0 0.0
        %1948 = vmatpush1.msra.mxu0 0.0
        %1949 = vmatprep.subr.mxu0 0.0
        %1950 = vmatpush1.msra.mxu0 0.0
        %1951 = vmatprep.subr.mxu0 0.0
        %1952 = vmatpush1.msra.mxu0 0.0
        %1953 = vmatprep.subr.mxu0 0.0
        %1954 = vmatpush1.msra.mxu0 0.0
        %1955 = vmatprep.subr.mxu0 0.0
        %1956 = vmatpush1.msra.mxu0 0.0
        %1957 = vmatprep.subr.mxu0 0.0
        %1958 = vmatpush1.msra.mxu0 0.0
        %1959 = vmatprep.subr.mxu0 0.0
        %1960 = vmatpush1.msra.mxu0 0.0
        %1961 = vmatprep.subr.mxu0 0.0
        %1962 = vmatpush1.msra.mxu0 0.0
        %1963 = vmatprep.subr.mxu0 0.0
        %1964 = vmatpush1.msra.mxu0 0.0
        %1965 = vmatprep.subr.mxu0 0.0
        %1966 = vmatpush1.msra.mxu0 0.0
        %1967 = vmatprep.subr.mxu0 0.0
        %1968 = vmatpush1.msra.mxu0 0.0
        %1969 = vmatprep.subr.mxu0 0.0
        %1970 = vmatpush1.msra.mxu0 0.0
        %1971 = vmatprep.subr.mxu0 0.0
        %1972 = vmatpush1.msra.mxu0 0.0
        %1973 = vmatprep.subr.mxu0 0.0
        %1974 = vmatpush1.msra.mxu0 0.0
        %1975 = vmatprep.subr.mxu0 0.0
        %1976 = vmatpush1.msra.mxu0 0.0
        %1977 = vmatprep.subr.mxu0 0.0
        %1978 = vmatpush1.msra.mxu0 0.0
        %1979 = vmatprep.subr.mxu0 0.0
        %1980 = vmatpush1.msra.mxu0 0.0
        %1981 = vmatprep.subr.mxu0 0.0
        %1982 = vmatpush1.msra.mxu0 0.0
        %1983 = vmatprep.subr.mxu0 0.0
        %1984 = vmatpush1.msra.mxu0 0.0
        %1985 = vmatprep.subr.mxu0 0.0
        %1986 = vmatpush1.msra.mxu0 0.0
        %1987 = vmatprep.subr.mxu0 0.0
        %1988 = vmatpush1.msra.mxu0 0.0
        %1989 = vmatprep.subr.mxu0 0.0
        %1990 = vmatpush1.msra.mxu0 0.0
        %1991 = vmatprep.subr.mxu0 0.0
        %1992 = vmatpush1.msra.mxu0 0.0
        %1993 = vmatprep.subr.mxu0 0.0
        %1994 = vmatpush1.msra.mxu0 0.0
        %1995 = vmatprep.subr.mxu0 0.0
        %1996 = vmatpush1.msra.mxu0 0.0
        %1997 = vmatprep.subr.mxu0 0.0
        %1998 = vmatpush1.msra.mxu0 0.0
        %1999 = vmatprep.subr.mxu0 0.0
        %2000 = vmatpush1.msra.mxu0 0.0
        %2001 = vmatprep.subr.mxu0 0.0
        %2002 = vmatpush1.msra.mxu0 0.0
        %2003 = vmatprep.subr.mxu0 0.0
        %2004 = vmatpush1.msra.mxu0 0.0
        %2005 = vmatprep.mubr.f32.mxu0 0.0
        %2006 = vmatmul.mubr.f32.gmra.mrb[0].mxu0 %v416
        %v2007 = vpop.f32.mrb[0].mxu0
        %v2008 = vadd.f32 0.0, %v2007
        %v2009 = vpop.f32.mrb[0].mxu0
        %2010 = vmatprep.mubr.f32.mxu0 0.0
        %2011 = vmatmul.mubr.f32.gmra.mrb[0].mxu0 %v419
        %v2012 = vpop.f32.mrb[0].mxu0
        %v2013 = vadd.f32 0.0, %v2012
        %v2014 = vpop.f32.mrb[0].mxu0
        %2015 = vdwg.mxu0
        %v2016 = vmul.f32 %v488, %v488
        %v2017 = vmul.f32 %v493, %v493
        %v2018 = vmul.f32 %v563, %v563
        %v2019 = vmul.f32 %v568, %v568
        %v2020 = vmul.f32 %v638, %v638
        %v2021 = vmul.f32 %v643, %v643
        %v2022 = vmul.f32 %v826, %v826
        %v2023 = vmul.f32 %v831, %v831
        %v2024 = vmul.f32 %v901, %v901
        %v2025 = vmul.f32 %v906, %v906
        %v2026 = vmul.f32 %v976, %v976
        %v2027 = vmul.f32 %v981, %v981
        %v2028 = vmul.f32 %v488, %v826
        %v2029 = vmul.f32 %v493, %v831
        %v2030 = vmul.f32 %v563, %v901
        %v2031 = vmul.f32 %v568, %v906
        %v2032 = vmul.f32 %v638, %v976
        %v2033 = vmul.f32 %v643, %v981
        %v2034 = vsub.f32 %v1170, %v2016
        %v2035 = vsub.f32 %v1175, %v2017
        %v2036 = vsub.f32 %v1245, %v2018
        %v2037 = vsub.f32 %v1250, %v2019
        %v2038 = vsub.f32 %v1320, %v2020
        %v2039 = vsub.f32 %v1325, %v2021
        %v2040 = vsub.f32 %v1514, %v2022
        %v2041 = vsub.f32 %v1519, %v2023
        %v2042 = vsub.f32 %v1589, %v2024
        %v2043 = vsub.f32 %v1594, %v2025
        %v2044 = vsub.f32 %v1664, %v2026
        %v2045 = vsub.f32 %v1669, %v2027
        %v2046 = vsub.f32 %v1858, %v2028
        %v2047 = vsub.f32 %v1863, %v2029
        %v2048 = vsub.f32 %v1933, %v2030
        %v2049 = vsub.f32 %v1938, %v2031
        %v2050 = vsub.f32 %v2008, %v2032
        %v2051 = vsub.f32 %v2013, %v2033
        %v2052 = vmul.f32 %v2028, 2.0
        %v2053 = vmul.f32 %v2029, 2.0
        %v2054 = vmul.f32 %v2030, 2.0
        %v2055 = vmul.f32 %v2031, 2.0
        %v2056 = vmul.f32 %v2032, 2.0
        %v2057 = vmul.f32 %v2033, 2.0
        %v2058 = vadd.f32 %v2052, 0.0001
        %v2059 = vadd.f32 %v2053, 0.0001
        %v2060 = vadd.f32 %v2054, 0.0001
        %v2061 = vadd.f32 %v2055, 0.0001
        %v2062 = vadd.f32 %v2056, 0.0001
        %v2063 = vadd.f32 %v2057, 0.0001
        %v2064 = vmul.f32 %v2046, 2.0
        %v2065 = vmul.f32 %v2047, 2.0
        %v2066 = vmul.f32 %v2048, 2.0
        %v2067 = vmul.f32 %v2049, 2.0
        %v2068 = vmul.f32 %v2050, 2.0
        %v2069 = vmul.f32 %v2051, 2.0
        %v2070 = vadd.f32 %v2064, 0.0009
        %v2071 = vadd.f32 %v2065, 0.0009
        %v2072 = vadd.f32 %v2066, 0.0009
        %v2073 = vadd.f32 %v2067, 0.0009
        %v2074 = vadd.f32 %v2068, 0.0009
        %v2075 = vadd.f32 %v2069, 0.0009
        %v2076 = vmul.f32 %v2058, %v2070
        %v2077 = vmul.f32 %v2059, %v2071
        %v2078 = vmul.f32 %v2060, %v2072
        %v2079 = vmul.f32 %v2061, %v2073
        %v2080 = vmul.f32 %v2062, %v2074
        %v2081 = vmul.f32 %v2063, %v2075
        %v2082 = vadd.f32 %v2016, %v2022
        %v2083 = vadd.f32 %v2017, %v2023
        %v2084 = vadd.f32 %v2018, %v2024
        %v2085 = vadd.f32 %v2019, %v2025
        %v2086 = vadd.f32 %v2020, %v2026
        %v2087 = vadd.f32 %v2021, %v2027
        %v2088 = vadd.f32 %v2082, 0.0001
        %v2089 = vadd.f32 %v2083, 0.0001
        %v2090 = vadd.f32 %v2084, 0.0001
        %v2091 = vadd.f32 %v2085, 0.0001
        %v2092 = vadd.f32 %v2086, 0.0001
        %v2093 = vadd.f32 %v2087, 0.0001
        %v2094 = vadd.f32 %v2034, %v2040
        %v2095 = vadd.f32 %v2035, %v2041
        %v2096 = vadd.f32 %v2036, %v2042
        %v2097 = vadd.f32 %v2037, %v2043
        %v2098 = vadd.f32 %v2038, %v2044
        %v2099 = vadd.f32 %v2039, %v2045
        %v2100 = vadd.f32 %v2094, 0.0009
        %v2101 = vadd.f32 %v2095, 0.0009
        %v2102 = vadd.f32 %v2096, 0.0009
        %v2103 = vadd.f32 %v2097, 0.0009
        %v2104 = vadd.f32 %v2098, 0.0009
        %v2105 = vadd.f32 %v2099, 0.0009
        %v2106 = vmul.f32 %v2088, %v2100
        %v2107 = vmul.f32 %v2089, %v2101
        %v2108 = vmul.f32 %v2090, %v2102
        %v2109 = vmul.f32 %v2091, %v2103
        %v2110 = vmul.f32 %v2092, %v2104
        %v2111 = vmul.f32 %v2093, %v2105
        %v2112 = vrcp.pop %v2106
        %v2113 = vmul.f32 %v2076, %v2112
        %v2114 = vrcp.pop %v2107
        %v2115 = vmul.f32 %v2077, %v2114
        %v2116 = vrcp.pop %v2108
        %v2117 = vmul.f32 %v2078, %v2116
        %v2118 = vrcp.pop %v2109
        %v2119 = vmul.f32 %v2079, %v2118
        %v2120 = vrcp.pop %v2110
        %v2121 = vmul.f32 %v2080, %v2120
        %v2122 = vrcp.pop %v2111
        %v2123 = vmul.f32 %v2081, %v2122
        %v2124 = vsel %vm301, %v2113, 0.0
        %v2125 = vsel %vm301, %v2115, 0.0
        %v2126 = vadd.f32 %v2124, %v2125
        %v2127 = vrot.slane %v2126, 4
        %v2128 = vadd.f32 %v2126, %v2127
        %v2129 = vrot.slane %v2128, 2
        %v2130 = vadd.f32 %v2128, %v2129
        %v2131 = vrot.slane %v2130, 1
        %v2132 = vadd.f32 %v2130, %v2131
        %v2133 = vsel %vm301, %v2117, 0.0
        %v2134 = vsel %vm301, %v2119, 0.0
        %v2135 = vadd.f32 %v2133, %v2134
        %v2136 = vrot.slane %v2135, 4
        %v2137 = vadd.f32 %v2135, %v2136
        %v2138 = vrot.slane %v2137, 2
        %v2139 = vadd.f32 %v2137, %v2138
        %v2140 = vrot.slane %v2139, 1
        %v2141 = vadd.f32 %v2139, %v2140
        %v2142 = vsel %vm301, %v2121, 0.0
        %v2143 = vsel %vm301, %v2123, 0.0
        %v2144 = vadd.f32 %v2142, %v2143
        %v2145 = vrot.slane %v2144, 4
        %v2146 = vadd.f32 %v2144, %v2145
        %v2147 = vrot.slane %v2146, 2
        %v2148 = vadd.f32 %v2146, %v2147
        %v2149 = vrot.slane %v2148, 1
        %v2150 = vadd.f32 %v2148, %v2149
        %vm2154 = vcmask 1041409
        %v2155 = vsel %vm2154, %v2141, %v2132
        %vm2156 = vcmask 1042434
        %v2157 = vsel %vm2156, %v2150, %v2155
        %vm2159 = vcmask 124928
        %2160 = vst.msk [vmem:[%s284] sm:$0x7] %vm2159, %v2157
        %p2161 = scmp.lt.s32.totalorder %s22, 1
        %s2162 = scalar_select %p2161, %s22, 1
        %s2163 = smul.addr %s2162, 4
        %s2164 = scalar_lea.vmem %s4, %s2163
        // Predicated region
        $region53: #{_lambda_.1} parent=35 // pred_check
          %p2165 = pneg %p134
        $region54: #{_lambda_.1} parent=35 // pred_check_branch
          %2167 = sbr.rel (%p2165) target = $region56
        $region55: #{_lambda_.1} parent=35 // pred_region
          _
        $region56: #{_lambda_.1} parent=35 // pred_fallthru
          _
      $region36: #{_lambda_.1} parent=5 // pred_fallthru
        _
      %p2168 = scmp.le.s32.totalorder 2, %s17
      // Predicated region
      $region57: #{_lambda_.1} parent=5 // pred_check
        %p2169 = pneg %p2168
      $region58: #{_lambda_.1} parent=5 // pred_check_branch
        %2171 = sbr.rel (%p2169) target = $region60
      $region59: #{_lambda_.1} parent=5 // pred_region
        %s2172 = ssub.s32 %s17, 2
        // Predicated region
        $region61: #{_lambda_.1} parent=59 // pred_check
          %p2173 = pneg %p140
        $region62: #{_lambda_.1} parent=59 // pred_check_branch
          %2175 = sbr.rel (%p2173) target = $region64
        $region63: #{_lambda_.1} parent=59 // pred_region
          %p2176 = scmp.lt.s32.totalorder %s23, 1
          %s2177 = scalar_select %p2176, %s23, 1
          %s2178 = smul.addr %s2177, 4
          %s2179 = scalar_lea.vmem %s4, %s2178
        $region64: #{_lambda_.1} parent=59 // pred_fallthru
          _
      $region60: #{_lambda_.1} parent=5 // pred_fallthru
        _
    $region6: #{_lambda_.1} parent=1 // loop_footer
      %s21 = sadd.s32 1, %s17
    $region7: #{_lambda_.1} parent=1 // loop_footer_branch
      %16 = sbr.rel target = $region3
    $region8: #{_lambda_.1} parent=1 // loop_exit
      _
    %2180 = vsyncpa [#allocation3], 1
    %s2181 = scalar_lea.sflag [#allocation3], 1
    %2182 = vsyncpa %s2181, 1
    %2183 = vsyncpa [#allocation5], 1
    %s2184 = scalar_lea.sflag [#allocation5], 1
    %2185 = vsyncpa %s2184, 1
    %2186 = vsyncpa [#allocation8], 1

</llo_original>
